<compile_context>
chip_gen: v7x
topology: tpu7x:2x2x1
jax: 0.10.0
libtpu: 0.0.40
codegen_flags: <defaults>
</compile_context>

<pallas_src>
import functools

import numpy as np
import jax
import jax.numpy as jnp
from jax.experimental import pallas as pl
from jax.experimental.pallas import tpu as pltpu

SCALE = 1000.0   # felzenszwalb(scale=1000)
SIGMA = 1.0      # felzenszwalb(sigma=1)
MIN_SIZE = 50    # felzenszwalb(min_size=50)
TRUNCATE = 4.0   # scipy.ndimage.gaussian_filter default

HALO = 16        # halo rows per tile; >= 2R+1 and a multiple of the (8,·) sublane tile


def _round_up(x, m):
    return (x + m - 1) // m * m


def _gauss_weights(sigma, truncate):
    r = int(truncate * sigma + 0.5)
    x = np.arange(-r, r + 1, dtype=np.float64)
    w = np.exp(-0.5 * (x / sigma) ** 2)
    w /= w.sum()
    return r, tuple(float(v) for v in w)


def _pick_block_rows(H):
    """Row-tile height: multiple of HALO (halo-block alignment); when H > 32 prefer
    >= 2 tiles with an even count (v7x has 2 TensorCores), then fewer tiles."""
    Hr = _round_up(H, 16)
    if Hr <= 32:
        return Hr                      # tiny problem: single tile
    best_bh, best_key = 32, None
    for cand in (64, 48, 32):
        if cand >= Hr:
            continue
        nt = -(-H // cand)
        key = (nt % 2, nt)             # prefer even tile count, then fewer tiles
        if best_key is None or key < best_key:
            best_bh, best_key = cand, key
    return best_bh


def _band_matrices(weights, R, BH, BHP, halo):
    """Banded vertical-blur matrices so the vertical Gaussian pass runs on the MXU.
    bc[i] = sum_k w[k] * tmp_local[i+k]; local rows [0,BH) come from the body block,
    rows [BH, BH+2R] from the halo block."""
    kb = np.zeros((BHP, BH), np.float32)
    kh = np.zeros((BHP, halo), np.float32)
    for i in range(BH + 1):            # rows 0..BH (row BH feeds the y+1 neighbour)
        for k in range(2 * R + 1):
            j = i + k
            if j < BH:
                kb[i, j] = weights[k]
            else:
                kh[i, j - BH] = weights[k]
    return jnp.asarray(kb), jnp.asarray(kh)


def _hblur(xc, weights, R, wp):
    """Horizontal Gaussian pass: tmp[:, j] = sum_k w[k] * xc[:, j+k] (lane rolls on the
    XLU/VPU).  Uses tap symmetry w[k] == w[2R-k]: one multiply per tap pair."""
    tmp = weights[R] * pltpu.roll(xc, shift=wp - R, axis=1)
    for k in range(R):
        lo = xc if k == 0 else pltpu.roll(xc, shift=wp - k, axis=1)
        hi = pltpu.roll(xc, shift=wp - (2 * R - k), axis=1)
        tmp = tmp + weights[k] * (lo + hi)
    return tmp


# ---------------------------------------------------------------------------
# Fused Pallas kernel: separable Gaussian blur + 8-connectivity edge weights.
#   kb_ref  : (BHP, BH)     vertical-blur band matrix (body rows)
#   kh_ref  : (BHP, HALO)   vertical-blur band matrix (halo rows)
#   body_ref: (C, BH, WP)   this tile's body rows of the padded image
#   halo_ref: (C, HALO, WP) the 2R+1 halo rows below the tile (16-row aligned block)
#   o_ref   : (4, BH, WO)   edge planes: 0=right, 1=down, 2=down-right, 3=down-left
# Wrap-around / padded-region values are garbage but never used: the host only builds
# in-bounds edges.
# ---------------------------------------------------------------------------
def _fused_kernel(kb_ref, kh_ref, body_ref, halo_ref, o_ref, *, weights, R, bh, bhp, wo):
    C = body_ref.shape[0]
    wp = body_ref.shape[2]
    kb = kb_ref[...]
    kh = kh_ref[...]

    right = down = dright = dleft = None
    for c in range(C):
        # horizontal blur per channel (body + halo rows of this channel only)
        tb = _hblur(body_ref[c], weights, R, wp)        # (BH,   WP)
        th = _hblur(halo_ref[c], weights, R, wp)        # (HALO, WP)
        # vertical blur on the MXU, restricted to the lane-dense output window
        bc = jnp.dot(kb, tb[:, :wo], preferred_element_type=jnp.float32)
        bc = bc + jnp.dot(kh, th[:, :wo], preferred_element_type=jnp.float32)  # (BHP, WO)

        # 8-neighbour differences, fused into the channel loop (no blurred[] kept live)
        bc_y1 = pltpu.roll(bc, shift=bhp - 1, axis=0)        # (y+1, x)
        bc_x1 = pltpu.roll(bc, shift=wo - 1, axis=1)         # (y,   x+1)
        bc_y1x1 = pltpu.roll(bc_y1, shift=wo - 1, axis=1)    # (y+1, x+1)
        bc_y1xm1 = pltpu.roll(bc_y1, shift=1, axis=1)        # (y+1, x-1)
        d0 = bc - bc_x1
        d1 = bc - bc_y1
        d2 = bc - bc_y1x1
        d3 = bc - bc_y1xm1
        if c == 0:
            right, down, dright, dleft = d0 * d0, d1 * d1, d2 * d2, d3 * d3
        else:
            right = right + d0 * d0
            down = down + d1 * d1
            dright = dright + d2 * d2
            dleft = dleft + d3 * d3

    # Slice to the (BH, WO) output window BEFORE the sqrt; stores are unmasked lane-dense.
    o_ref[0] = jnp.sqrt(right[:bh])
    o_ref[1] = jnp.sqrt(down[:bh])
    o_ref[2] = jnp.sqrt(dright[:bh])
    o_ref[3] = jnp.sqrt(dleft[:bh])


# ---------------------------------------------------------------------------
# Host-side Felzenszwalb merge (sequential union-find; no Pallas equivalent).
# ---------------------------------------------------------------------------
def _felzenszwalb_merge(costs, eu, ev, n, scale, min_size):
    # stable sort kept for deterministic tie-breaking (skimage uses an unstable sort;
    # tie-breaks may relabel equivalent segmentations).
    order = np.argsort(costs, kind="stable")
    parent = np.arange(n)
    size_ = np.ones(n, np.int64)
    thresh = np.full(n, float(scale))

    def find(x):
        root = x
        while parent[root] != root:
            root = parent[root]
        while parent[x] != root:
            parent[x], x = root, parent[x]
        return root

    for e in order:
        a, b = find(eu[e]), find(ev[e])
        w = costs[e]
        if a != b and w <= thresh[a] and w <= thresh[b]:
            size_[a] += size_[b]
            parent[b] = a
            thresh[a] = w + scale / size_[a]

    for e in order:  # enforce min_size
        a, b = find(eu[e]), find(ev[e])
        if a != b and (size_[a] < min_size or size_[b] < min_size):
            size_[a] += size_[b]
            parent[b] = a

    roots = np.array([find(i) for i in range(n)])
    _, labels = np.unique(roots, return_inverse=True)
    return labels


# ---------------------------------------------------------------------------
# Wrapper replicating SuperpixelSegment.forward(img, img_size)
# ---------------------------------------------------------------------------
def superpixel_segment(img, img_size):
    H = W = int(img_size)
    C = img.shape[-1]
    R, weights = _gauss_weights(SIGMA, TRUNCATE)

    x = jnp.transpose(img.astype(jnp.float32), (2, 0, 1))             # (C, H, W)
    # "symmetric" (edge repeated) matches scipy.ndimage.gaussian_filter's default 'reflect'.
    xp = jnp.pad(x, ((0, 0), (R, R), (R, R)), mode="symmetric")       # (C, H+2R, W+2R)

    BH = _pick_block_rows(H)                       # multiple of HALO (=16)
    nt = -(-H // BH)
    BHP = _round_up(BH + 1, 8)                     # blurred rows needed (+1 for y+1)
    WP = _round_up(W + 2 * R, 128)                 # lane-padded input width
    WO = _round_up(W, 128)                         # lane-dense output width
    ROWS = nt * BH + HALO                          # body rows + last tile's halo block

    # Single padded image in HBM; NO duplicated overlapping-tile buffer.  Each grid step
    # reads its BH body rows plus the next 16-row (16 | BH) halo block via two BlockSpecs.
    xp = jnp.pad(xp, ((0, 0), (0, ROWS - (H + 2 * R)), (0, WP - (W + 2 * R))))
    kb, kh = _band_matrices(weights, R, BH, BHP, HALO)

    # Explicit VMEM budget (double-buffered blocks + live temporaries), with headroom;
    # v5e scoped default is 16 MiB, v7x 32 MiB.
    vmem_est = 4 * (2 * BHP * (BH + HALO)              # band matrices (double-buffered)
                    + 2 * C * (BH + HALO) * WP         # body + halo input blocks
                    + 2 * 4 * BH * WO                  # output block
                    + 16 * BHP * WO + 6 * BH * WP)     # accumulators + working set
    vmem_limit = int(min(56 * 2 ** 20, max(32 * 2 ** 20, 2 * vmem_est)))

    hb = BH // HALO
    edge = pl.pallas_call(
        functools.partial(_fused_kernel, weights=weights, R=R, bh=BH, bhp=BHP, wo=WO),
        out_shape=jax.ShapeDtypeStruct((4, nt * BH, WO), jnp.float32),
        grid=(nt,),
        in_specs=[
            pl.BlockSpec((BHP, BH), lambda t: (0, 0)),                  # kb (tiny)
            pl.BlockSpec((BHP, HALO), lambda t: (0, 0)),                # kh (tiny)
            pl.BlockSpec((C, BH, WP), lambda t: (0, t, 0)),             # body rows
            pl.BlockSpec((C, HALO, WP), lambda t: (0, (t + 1) * hb, 0)),  # halo rows
        ],
        out_specs=pl.BlockSpec((4, BH, WO), lambda t: (0, t, 0)),
        compiler_params=pltpu.CompilerParams(
            dimension_semantics=("parallel",),
            vmem_limit_bytes=vmem_limit),
    )(kb, kh, xp, xp)

    # Single device->host transfer of the final result; crop the alignment padding.
    edge_w = np.asarray(jax.block_until_ready(edge))[:, :H, :W]

    # Build the in-bounds 8-connectivity edge list on host.
    ys, xs = np.meshgrid(np.arange(H), np.arange(W), indexing="ij")
    idx = ys * W + xs
    us, vs, ws = [], [], []
    m = xs < W - 1                       # right
    us.append(idx[m]); vs.append(idx[m] + 1); ws.append(edge_w[0][m])
    m = ys < H - 1                       # down
    us.append(idx[m]); vs.append(idx[m] + W); ws.append(edge_w[1][m])
    m = (ys < H - 1) & (xs < W - 1)      # down-right
    us.append(idx[m]); vs.append(idx[m] + W + 1); ws.append(edge_w[2][m])
    m = (ys < H - 1) & (xs > 0)          # down-left
    us.append(idx[m]); vs.append(idx[m] + W - 1); ws.append(edge_w[3][m])
    u = np.concatenate(us); v = np.concatenate(vs); w = np.concatenate(ws)

    labels = _felzenszwalb_merge(w, u, v, H * W, SCALE, MIN_SIZE)
    # forward() returns segments_fz.reshape((img_size, img_size, 1))
    return labels.reshape(img_size, img_size, 1).astype(np.int32)


if __name__ == "__main__":
    key = jax.random.PRNGKey(0)
    img_size = 16
    img = jax.random.uniform(key, (img_size, img_size, 3), dtype=jnp.float32)
    seg = superpixel_segment(img, img_size)
    assert seg.shape == (img_size, img_size, 1)
    assert seg.dtype == np.int32
    print("KERNEL_OK")
</pallas_src>

<mosaic_0001>
module attributes {stable_mosaic.version = 11 : i64} {
  func.func @_fused_kernel(%arg0: i32, %arg1: memref<24x16xf32, #tpu.memory_space<vmem>>, %arg2: memref<24x16xf32, #tpu.memory_space<vmem>>, %arg3: memref<3x16x128xf32, #tpu.memory_space<vmem>>, %arg4: memref<3x16x128xf32, #tpu.memory_space<vmem>>, %arg5: memref<4x16x128xf32, #tpu.memory_space<vmem>>) attributes {dimension_semantics = [#tpu.dimension_semantics<parallel>], iteration_bounds = array<i64: 1>, scalar_prefetch = 0 : i64, scratch_operands = 0 : i64, tpu.core_type = #tpu.core_type<tc>, window_params = [{pipeline_mode = #tpu.pipeline_mode<synchronous>, transform_indices = @transform_0, window_bounds = array<i64: 24, 16>}, {pipeline_mode = #tpu.pipeline_mode<synchronous>, transform_indices = @transform_1, window_bounds = array<i64: 24, 16>}, {transform_indices = @transform_2, window_bounds = array<i64: 3, 16, 128>}, {transform_indices = @transform_3, window_bounds = array<i64: 3, 16, 128>}, {transform_indices = @transform_4, window_bounds = array<i64: 4, 16, 128>}]} {
    %c0 = arith.constant 0 : index
    %c0_0 = arith.constant 0 : index
    %0 = vector.load %arg1[%c0, %c0_0] : memref<24x16xf32, #tpu.memory_space<vmem>>, vector<24x16xf32>
    %c0_1 = arith.constant 0 : index
    %c0_2 = arith.constant 0 : index
    %1 = vector.load %arg2[%c0_1, %c0_2] : memref<24x16xf32, #tpu.memory_space<vmem>>, vector<24x16xf32>
    %c0_3 = arith.constant 0 : index
    %c0_4 = arith.constant 0 : index
    %c0_5 = arith.constant 0 : index
    %2 = vector.load %arg3[%c0_3, %c0_4, %c0_5] : memref<3x16x128xf32, #tpu.memory_space<vmem>>, vector<1x16x128xf32>
    %3 = vector.shape_cast %2 : vector<1x16x128xf32> to vector<16x128xf32>
    %c124_i32 = arith.constant 124 : i32
    %4 = tpu.dynamic_rotate %3 by %c124_i32 dim 1 : vector<16x128xf32>, i32 -> vector<16x128xf32>
    %cst = arith.constant 0.398943484 : f32
    %5 = vector.broadcast %cst : f32 to vector<16x128xf32>
    %6 = arith.mulf %5, %4 : vector<16x128xf32>
    %c120_i32 = arith.constant 120 : i32
    %7 = tpu.dynamic_rotate %3 by %c120_i32 dim 1 : vector<16x128xf32>, i32 -> vector<16x128xf32>
    %8 = arith.addf %3, %7 : vector<16x128xf32>
    %cst_6 = arith.constant 1.33830617E-4 : f32
    %9 = vector.broadcast %cst_6 : f32 to vector<16x128xf32>
    %10 = arith.mulf %9, %8 : vector<16x128xf32>
    %11 = arith.addf %6, %10 : vector<16x128xf32>
    %c127_i32 = arith.constant 127 : i32
    %12 = tpu.dynamic_rotate %3 by %c127_i32 dim 1 : vector<16x128xf32>, i32 -> vector<16x128xf32>
    %c121_i32 = arith.constant 121 : i32
    %13 = tpu.dynamic_rotate %3 by %c121_i32 dim 1 : vector<16x128xf32>, i32 -> vector<16x128xf32>
    %14 = arith.addf %12, %13 : vector<16x128xf32>
    %cst_7 = arith.constant 0.00443186145 : f32
    %15 = vector.broadcast %cst_7 : f32 to vector<16x128xf32>
    %16 = arith.mulf %15, %14 : vector<16x128xf32>
    %17 = arith.addf %11, %16 : vector<16x128xf32>
    %c126_i32 = arith.constant 126 : i32
    %18 = tpu.dynamic_rotate %3 by %c126_i32 dim 1 : vector<16x128xf32>, i32 -> vector<16x128xf32>
    %c122_i32 = arith.constant 122 : i32
    %19 = tpu.dynamic_rotate %3 by %c122_i32 dim 1 : vector<16x128xf32>, i32 -> vector<16x128xf32>
    %20 = arith.addf %18, %19 : vector<16x128xf32>
    %cst_8 = arith.constant 0.0539911278 : f32
    %21 = vector.broadcast %cst_8 : f32 to vector<16x128xf32>
    %22 = arith.mulf %21, %20 : vector<16x128xf32>
    %23 = arith.addf %17, %22 : vector<16x128xf32>
    %c125_i32 = arith.constant 125 : i32
    %24 = tpu.dynamic_rotate %3 by %c125_i32 dim 1 : vector<16x128xf32>, i32 -> vector<16x128xf32>
    %c123_i32 = arith.constant 123 : i32
    %25 = tpu.dynamic_rotate %3 by %c123_i32 dim 1 : vector<16x128xf32>, i32 -> vector<16x128xf32>
    %26 = arith.addf %24, %25 : vector<16x128xf32>
    %cst_9 = arith.constant 0.241971448 : f32
    %27 = vector.broadcast %cst_9 : f32 to vector<16x128xf32>
    %28 = arith.mulf %27, %26 : vector<16x128xf32>
    %29 = arith.addf %23, %28 : vector<16x128xf32>
    %c0_10 = arith.constant 0 : index
    %c0_11 = arith.constant 0 : index
    %c0_12 = arith.constant 0 : index
    %30 = vector.load %arg4[%c0_10, %c0_11, %c0_12] : memref<3x16x128xf32, #tpu.memory_space<vmem>>, vector<1x16x128xf32>
    %31 = vector.shape_cast %30 : vector<1x16x128xf32> to vector<16x128xf32>
    %c124_i32_13 = arith.constant 124 : i32
    %32 = tpu.dynamic_rotate %31 by %c124_i32_13 dim 1 : vector<16x128xf32>, i32 -> vector<16x128xf32>
    %cst_14 = arith.constant 0.398943484 : f32
    %33 = vector.broadcast %cst_14 : f32 to vector<16x128xf32>
    %34 = arith.mulf %33, %32 : vector<16x128xf32>
    %c120_i32_15 = arith.constant 120 : i32
    %35 = tpu.dynamic_rotate %31 by %c120_i32_15 dim 1 : vector<16x128xf32>, i32 -> vector<16x128xf32>
    %36 = arith.addf %31, %35 : vector<16x128xf32>
    %cst_16 = arith.constant 1.33830617E-4 : f32
    %37 = vector.broadcast %cst_16 : f32 to vector<16x128xf32>
    %38 = arith.mulf %37, %36 : vector<16x128xf32>
    %39 = arith.addf %34, %38 : vector<16x128xf32>
    %c127_i32_17 = arith.constant 127 : i32
    %40 = tpu.dynamic_rotate %31 by %c127_i32_17 dim 1 : vector<16x128xf32>, i32 -> vector<16x128xf32>
    %c121_i32_18 = arith.constant 121 : i32
    %41 = tpu.dynamic_rotate %31 by %c121_i32_18 dim 1 : vector<16x128xf32>, i32 -> vector<16x128xf32>
    %42 = arith.addf %40, %41 : vector<16x128xf32>
    %cst_19 = arith.constant 0.00443186145 : f32
    %43 = vector.broadcast %cst_19 : f32 to vector<16x128xf32>
    %44 = arith.mulf %43, %42 : vector<16x128xf32>
    %45 = arith.addf %39, %44 : vector<16x128xf32>
    %c126_i32_20 = arith.constant 126 : i32
    %46 = tpu.dynamic_rotate %31 by %c126_i32_20 dim 1 : vector<16x128xf32>, i32 -> vector<16x128xf32>
    %c122_i32_21 = arith.constant 122 : i32
    %47 = tpu.dynamic_rotate %31 by %c122_i32_21 dim 1 : vector<16x128xf32>, i32 -> vector<16x128xf32>
    %48 = arith.addf %46, %47 : vector<16x128xf32>
    %cst_22 = arith.constant 0.0539911278 : f32
    %49 = vector.broadcast %cst_22 : f32 to vector<16x128xf32>
    %50 = arith.mulf %49, %48 : vector<16x128xf32>
    %51 = arith.addf %45, %50 : vector<16x128xf32>
    %c125_i32_23 = arith.constant 125 : i32
    %52 = tpu.dynamic_rotate %31 by %c125_i32_23 dim 1 : vector<16x128xf32>, i32 -> vector<16x128xf32>
    %c123_i32_24 = arith.constant 123 : i32
    %53 = tpu.dynamic_rotate %31 by %c123_i32_24 dim 1 : vector<16x128xf32>, i32 -> vector<16x128xf32>
    %54 = arith.addf %52, %53 : vector<16x128xf32>
    %cst_25 = arith.constant 0.241971448 : f32
    %55 = vector.broadcast %cst_25 : f32 to vector<16x128xf32>
    %56 = arith.mulf %55, %54 : vector<16x128xf32>
    %57 = arith.addf %51, %56 : vector<16x128xf32>
    %cst_26 = arith.constant dense<0.000000e+00> : vector<24x128xf32>
    %58 = tpu.matmul %0, %29, %cst_26 {dimension_numbers = #tpu.dot_dimension_numbers<[1], [0], [0], [1], [0, 0, 1, 1], [], []>} : vector<24x16xf32>, vector<16x128xf32>, vector<24x128xf32> -> vector<24x128xf32>
    %cst_27 = arith.constant dense<0.000000e+00> : vector<24x128xf32>
    %59 = tpu.matmul %1, %57, %cst_27 {dimension_numbers = #tpu.dot_dimension_numbers<[1], [0], [0], [1], [0, 0, 1, 1], [], []>} : vector<24x16xf32>, vector<16x128xf32>, vector<24x128xf32> -> vector<24x128xf32>
    %60 = arith.addf %58, %59 : vector<24x128xf32>
    %c23_i32 = arith.constant 23 : i32
    %61 = tpu.dynamic_rotate %60 by %c23_i32 dim 0 : vector<24x128xf32>, i32 -> vector<24x128xf32>
    %c127_i32_28 = arith.constant 127 : i32
    %62 = tpu.dynamic_rotate %60 by %c127_i32_28 dim 1 : vector<24x128xf32>, i32 -> vector<24x128xf32>
    %c127_i32_29 = arith.constant 127 : i32
    %63 = tpu.dynamic_rotate %61 by %c127_i32_29 dim 1 : vector<24x128xf32>, i32 -> vector<24x128xf32>
    %c1_i32 = arith.constant 1 : i32
    %64 = tpu.dynamic_rotate %61 by %c1_i32 dim 1 : vector<24x128xf32>, i32 -> vector<24x128xf32>
    %65 = arith.subf %60, %62 : vector<24x128xf32>
    %66 = arith.subf %60, %61 : vector<24x128xf32>
    %67 = arith.subf %60, %63 : vector<24x128xf32>
    %68 = arith.subf %60, %64 : vector<24x128xf32>
    %69 = arith.mulf %65, %65 : vector<24x128xf32>
    %70 = arith.mulf %66, %66 : vector<24x128xf32>
    %71 = arith.mulf %67, %67 : vector<24x128xf32>
    %72 = arith.mulf %68, %68 : vector<24x128xf32>
    %c1 = arith.constant 1 : index
    %c0_30 = arith.constant 0 : index
    %c0_31 = arith.constant 0 : index
    %73 = vector.load %arg3[%c1, %c0_30, %c0_31] : memref<3x16x128xf32, #tpu.memory_space<vmem>>, vector<1x16x128xf32>
    %74 = vector.shape_cast %73 : vector<1x16x128xf32> to vector<16x128xf32>
    %c124_i32_32 = arith.constant 124 : i32
    %75 = tpu.dynamic_rotate %74 by %c124_i32_32 dim 1 : vector<16x128xf32>, i32 -> vector<16x128xf32>
    %cst_33 = arith.constant 0.398943484 : f32
    %76 = vector.broadcast %cst_33 : f32 to vector<16x128xf32>
    %77 = arith.mulf %76, %75 : vector<16x128xf32>
    %c120_i32_34 = arith.constant 120 : i32
    %78 = tpu.dynamic_rotate %74 by %c120_i32_34 dim 1 : vector<16x128xf32>, i32 -> vector<16x128xf32>
    %79 = arith.addf %74, %78 : vector<16x128xf32>
    %cst_35 = arith.constant 1.33830617E-4 : f32
    %80 = vector.broadcast %cst_35 : f32 to vector<16x128xf32>
    %81 = arith.mulf %80, %79 : vector<16x128xf32>
    %82 = arith.addf %77, %81 : vector<16x128xf32>
    %c127_i32_36 = arith.constant 127 : i32
    %83 = tpu.dynamic_rotate %74 by %c127_i32_36 dim 1 : vector<16x128xf32>, i32 -> vector<16x128xf32>
    %c121_i32_37 = arith.constant 121 : i32
    %84 = tpu.dynamic_rotate %74 by %c121_i32_37 dim 1 : vector<16x128xf32>, i32 -> vector<16x128xf32>
    %85 = arith.addf %83, %84 : vector<16x128xf32>
    %cst_38 = arith.constant 0.00443186145 : f32
    %86 = vector.broadcast %cst_38 : f32 to vector<16x128xf32>
    %87 = arith.mulf %86, %85 : vector<16x128xf32>
    %88 = arith.addf %82, %87 : vector<16x128xf32>
    %c126_i32_39 = arith.constant 126 : i32
    %89 = tpu.dynamic_rotate %74 by %c126_i32_39 dim 1 : vector<16x128xf32>, i32 -> vector<16x128xf32>
    %c122_i32_40 = arith.constant 122 : i32
    %90 = tpu.dynamic_rotate %74 by %c122_i32_40 dim 1 : vector<16x128xf32>, i32 -> vector<16x128xf32>
    %91 = arith.addf %89, %90 : vector<16x128xf32>
    %cst_41 = arith.constant 0.0539911278 : f32
    %92 = vector.broadcast %cst_41 : f32 to vector<16x128xf32>
    %93 = arith.mulf %92, %91 : vector<16x128xf32>
    %94 = arith.addf %88, %93 : vector<16x128xf32>
    %c125_i32_42 = arith.constant 125 : i32
    %95 = tpu.dynamic_rotate %74 by %c125_i32_42 dim 1 : vector<16x128xf32>, i32 -> vector<16x128xf32>
    %c123_i32_43 = arith.constant 123 : i32
    %96 = tpu.dynamic_rotate %74 by %c123_i32_43 dim 1 : vector<16x128xf32>, i32 -> vector<16x128xf32>
    %97 = arith.addf %95, %96 : vector<16x128xf32>
    %cst_44 = arith.constant 0.241971448 : f32
    %98 = vector.broadcast %cst_44 : f32 to vector<16x128xf32>
    %99 = arith.mulf %98, %97 : vector<16x128xf32>
    %100 = arith.addf %94, %99 : vector<16x128xf32>
    %c1_45 = arith.constant 1 : index
    %c0_46 = arith.constant 0 : index
    %c0_47 = arith.constant 0 : index
    %101 = vector.load %arg4[%c1_45, %c0_46, %c0_47] : memref<3x16x128xf32, #tpu.memory_space<vmem>>, vector<1x16x128xf32>
    %102 = vector.shape_cast %101 : vector<1x16x128xf32> to vector<16x128xf32>
    %c124_i32_48 = arith.constant 124 : i32
    %103 = tpu.dynamic_rotate %102 by %c124_i32_48 dim 1 : vector<16x128xf32>, i32 -> vector<16x128xf32>
    %cst_49 = arith.constant 0.398943484 : f32
    %104 = vector.broadcast %cst_49 : f32 to vector<16x128xf32>
    %105 = arith.mulf %104, %103 : vector<16x128xf32>
    %c120_i32_50 = arith.constant 120 : i32
    %106 = tpu.dynamic_rotate %102 by %c120_i32_50 dim 1 : vector<16x128xf32>, i32 -> vector<16x128xf32>
    %107 = arith.addf %102, %106 : vector<16x128xf32>
    %cst_51 = arith.constant 1.33830617E-4 : f32
    %108 = vector.broadcast %cst_51 : f32 to vector<16x128xf32>
    %109 = arith.mulf %108, %107 : vector<16x128xf32>
    %110 = arith.addf %105, %109 : vector<16x128xf32>
    %c127_i32_52 = arith.constant 127 : i32
    %111 = tpu.dynamic_rotate %102 by %c127_i32_52 dim 1 : vector<16x128xf32>, i32 -> vector<16x128xf32>
    %c121_i32_53 = arith.constant 121 : i32
    %112 = tpu.dynamic_rotate %102 by %c121_i32_53 dim 1 : vector<16x128xf32>, i32 -> vector<16x128xf32>
    %113 = arith.addf %111, %112 : vector<16x128xf32>
    %cst_54 = arith.constant 0.00443186145 : f32
    %114 = vector.broadcast %cst_54 : f32 to vector<16x128xf32>
    %115 = arith.mulf %114, %113 : vector<16x128xf32>
    %116 = arith.addf %110, %115 : vector<16x128xf32>
    %c126_i32_55 = arith.constant 126 : i32
    %117 = tpu.dynamic_rotate %102 by %c126_i32_55 dim 1 : vector<16x128xf32>, i32 -> vector<16x128xf32>
    %c122_i32_56 = arith.constant 122 : i32
    %118 = tpu.dynamic_rotate %102 by %c122_i32_56 dim 1 : vector<16x128xf32>, i32 -> vector<16x128xf32>
    %119 = arith.addf %117, %118 : vector<16x128xf32>
    %cst_57 = arith.constant 0.0539911278 : f32
    %120 = vector.broadcast %cst_57 : f32 to vector<16x128xf32>
    %121 = arith.mulf %120, %119 : vector<16x128xf32>
    %122 = arith.addf %116, %121 : vector<16x128xf32>
    %c125_i32_58 = arith.constant 125 : i32
    %123 = tpu.dynamic_rotate %102 by %c125_i32_58 dim 1 : vector<16x128xf32>, i32 -> vector<16x128xf32>
    %c123_i32_59 = arith.constant 123 : i32
    %124 = tpu.dynamic_rotate %102 by %c123_i32_59 dim 1 : vector<16x128xf32>, i32 -> vector<16x128xf32>
    %125 = arith.addf %123, %124 : vector<16x128xf32>
    %cst_60 = arith.constant 0.241971448 : f32
    %126 = vector.broadcast %cst_60 : f32 to vector<16x128xf32>
    %127 = arith.mulf %126, %125 : vector<16x128xf32>
    %128 = arith.addf %122, %127 : vector<16x128xf32>
    %cst_61 = arith.constant dense<0.000000e+00> : vector<24x128xf32>
    %129 = tpu.matmul %0, %100, %cst_61 {dimension_numbers = #tpu.dot_dimension_numbers<[1], [0], [0], [1], [0, 0, 1, 1], [], []>} : vector<24x16xf32>, vector<16x128xf32>, vector<24x128xf32> -> vector<24x128xf32>
    %cst_62 = arith.constant dense<0.000000e+00> : vector<24x128xf32>
    %130 = tpu.matmul %1, %128, %cst_62 {dimension_numbers = #tpu.dot_dimension_numbers<[1], [0], [0], [1], [0, 0, 1, 1], [], []>} : vector<24x16xf32>, vector<16x128xf32>, vector<24x128xf32> -> vector<24x128xf32>
    %131 = arith.addf %129, %130 : vector<24x128xf32>
    %c23_i32_63 = arith.constant 23 : i32
    %132 = tpu.dynamic_rotate %131 by %c23_i32_63 dim 0 : vector<24x128xf32>, i32 -> vector<24x128xf32>
    %c127_i32_64 = arith.constant 127 : i32
    %133 = tpu.dynamic_rotate %131 by %c127_i32_64 dim 1 : vector<24x128xf32>, i32 -> vector<24x128xf32>
    %c127_i32_65 = arith.constant 127 : i32
    %134 = tpu.dynamic_rotate %132 by %c127_i32_65 dim 1 : vector<24x128xf32>, i32 -> vector<24x128xf32>
    %c1_i32_66 = arith.constant 1 : i32
    %135 = tpu.dynamic_rotate %132 by %c1_i32_66 dim 1 : vector<24x128xf32>, i32 -> vector<24x128xf32>
    %136 = arith.subf %131, %133 : vector<24x128xf32>
    %137 = arith.subf %131, %132 : vector<24x128xf32>
    %138 = arith.subf %131, %134 : vector<24x128xf32>
    %139 = arith.subf %131, %135 : vector<24x128xf32>
    %140 = arith.mulf %136, %136 : vector<24x128xf32>
    %141 = arith.addf %69, %140 : vector<24x128xf32>
    %142 = arith.mulf %137, %137 : vector<24x128xf32>
    %143 = arith.addf %70, %142 : vector<24x128xf32>
    %144 = arith.mulf %138, %138 : vector<24x128xf32>
    %145 = arith.addf %71, %144 : vector<24x128xf32>
    %146 = arith.mulf %139, %139 : vector<24x128xf32>
    %147 = arith.addf %72, %146 : vector<24x128xf32>
    %c2 = arith.constant 2 : index
    %c0_67 = arith.constant 0 : index
    %c0_68 = arith.constant 0 : index
    %148 = vector.load %arg3[%c2, %c0_67, %c0_68] : memref<3x16x128xf32, #tpu.memory_space<vmem>>, vector<1x16x128xf32>
    %149 = vector.shape_cast %148 : vector<1x16x128xf32> to vector<16x128xf32>
    %c124_i32_69 = arith.constant 124 : i32
    %150 = tpu.dynamic_rotate %149 by %c124_i32_69 dim 1 : vector<16x128xf32>, i32 -> vector<16x128xf32>
    %cst_70 = arith.constant 0.398943484 : f32
    %151 = vector.broadcast %cst_70 : f32 to vector<16x128xf32>
    %152 = arith.mulf %151, %150 : vector<16x128xf32>
    %c120_i32_71 = arith.constant 120 : i32
    %153 = tpu.dynamic_rotate %149 by %c120_i32_71 dim 1 : vector<16x128xf32>, i32 -> vector<16x128xf32>
    %154 = arith.addf %149, %153 : vector<16x128xf32>
    %cst_72 = arith.constant 1.33830617E-4 : f32
    %155 = vector.broadcast %cst_72 : f32 to vector<16x128xf32>
    %156 = arith.mulf %155, %154 : vector<16x128xf32>
    %157 = arith.addf %152, %156 : vector<16x128xf32>
    %c127_i32_73 = arith.constant 127 : i32
    %158 = tpu.dynamic_rotate %149 by %c127_i32_73 dim 1 : vector<16x128xf32>, i32 -> vector<16x128xf32>
    %c121_i32_74 = arith.constant 121 : i32
    %159 = tpu.dynamic_rotate %149 by %c121_i32_74 dim 1 : vector<16x128xf32>, i32 -> vector<16x128xf32>
    %160 = arith.addf %158, %159 : vector<16x128xf32>
    %cst_75 = arith.constant 0.00443186145 : f32
    %161 = vector.broadcast %cst_75 : f32 to vector<16x128xf32>
    %162 = arith.mulf %161, %160 : vector<16x128xf32>
    %163 = arith.addf %157, %162 : vector<16x128xf32>
    %c126_i32_76 = arith.constant 126 : i32
    %164 = tpu.dynamic_rotate %149 by %c126_i32_76 dim 1 : vector<16x128xf32>, i32 -> vector<16x128xf32>
    %c122_i32_77 = arith.constant 122 : i32
    %165 = tpu.dynamic_rotate %149 by %c122_i32_77 dim 1 : vector<16x128xf32>, i32 -> vector<16x128xf32>
    %166 = arith.addf %164, %165 : vector<16x128xf32>
    %cst_78 = arith.constant 0.0539911278 : f32
    %167 = vector.broadcast %cst_78 : f32 to vector<16x128xf32>
    %168 = arith.mulf %167, %166 : vector<16x128xf32>
    %169 = arith.addf %163, %168 : vector<16x128xf32>
    %c125_i32_79 = arith.constant 125 : i32
    %170 = tpu.dynamic_rotate %149 by %c125_i32_79 dim 1 : vector<16x128xf32>, i32 -> vector<16x128xf32>
    %c123_i32_80 = arith.constant 123 : i32
    %171 = tpu.dynamic_rotate %149 by %c123_i32_80 dim 1 : vector<16x128xf32>, i32 -> vector<16x128xf32>
    %172 = arith.addf %170, %171 : vector<16x128xf32>
    %cst_81 = arith.constant 0.241971448 : f32
    %173 = vector.broadcast %cst_81 : f32 to vector<16x128xf32>
    %174 = arith.mulf %173, %172 : vector<16x128xf32>
    %175 = arith.addf %169, %174 : vector<16x128xf32>
    %c2_82 = arith.constant 2 : index
    %c0_83 = arith.constant 0 : index
    %c0_84 = arith.constant 0 : index
    %176 = vector.load %arg4[%c2_82, %c0_83, %c0_84] : memref<3x16x128xf32, #tpu.memory_space<vmem>>, vector<1x16x128xf32>
    %177 = vector.shape_cast %176 : vector<1x16x128xf32> to vector<16x128xf32>
    %c124_i32_85 = arith.constant 124 : i32
    %178 = tpu.dynamic_rotate %177 by %c124_i32_85 dim 1 : vector<16x128xf32>, i32 -> vector<16x128xf32>
    %cst_86 = arith.constant 0.398943484 : f32
    %179 = vector.broadcast %cst_86 : f32 to vector<16x128xf32>
    %180 = arith.mulf %179, %178 : vector<16x128xf32>
    %c120_i32_87 = arith.constant 120 : i32
    %181 = tpu.dynamic_rotate %177 by %c120_i32_87 dim 1 : vector<16x128xf32>, i32 -> vector<16x128xf32>
    %182 = arith.addf %177, %181 : vector<16x128xf32>
    %cst_88 = arith.constant 1.33830617E-4 : f32
    %183 = vector.broadcast %cst_88 : f32 to vector<16x128xf32>
    %184 = arith.mulf %183, %182 : vector<16x128xf32>
    %185 = arith.addf %180, %184 : vector<16x128xf32>
    %c127_i32_89 = arith.constant 127 : i32
    %186 = tpu.dynamic_rotate %177 by %c127_i32_89 dim 1 : vector<16x128xf32>, i32 -> vector<16x128xf32>
    %c121_i32_90 = arith.constant 121 : i32
    %187 = tpu.dynamic_rotate %177 by %c121_i32_90 dim 1 : vector<16x128xf32>, i32 -> vector<16x128xf32>
    %188 = arith.addf %186, %187 : vector<16x128xf32>
    %cst_91 = arith.constant 0.00443186145 : f32
    %189 = vector.broadcast %cst_91 : f32 to vector<16x128xf32>
    %190 = arith.mulf %189, %188 : vector<16x128xf32>
    %191 = arith.addf %185, %190 : vector<16x128xf32>
    %c126_i32_92 = arith.constant 126 : i32
    %192 = tpu.dynamic_rotate %177 by %c126_i32_92 dim 1 : vector<16x128xf32>, i32 -> vector<16x128xf32>
    %c122_i32_93 = arith.constant 122 : i32
    %193 = tpu.dynamic_rotate %177 by %c122_i32_93 dim 1 : vector<16x128xf32>, i32 -> vector<16x128xf32>
    %194 = arith.addf %192, %193 : vector<16x128xf32>
    %cst_94 = arith.constant 0.0539911278 : f32
    %195 = vector.broadcast %cst_94 : f32 to vector<16x128xf32>
    %196 = arith.mulf %195, %194 : vector<16x128xf32>
    %197 = arith.addf %191, %196 : vector<16x128xf32>
    %c125_i32_95 = arith.constant 125 : i32
    %198 = tpu.dynamic_rotate %177 by %c125_i32_95 dim 1 : vector<16x128xf32>, i32 -> vector<16x128xf32>
    %c123_i32_96 = arith.constant 123 : i32
    %199 = tpu.dynamic_rotate %177 by %c123_i32_96 dim 1 : vector<16x128xf32>, i32 -> vector<16x128xf32>
    %200 = arith.addf %198, %199 : vector<16x128xf32>
    %cst_97 = arith.constant 0.241971448 : f32
    %201 = vector.broadcast %cst_97 : f32 to vector<16x128xf32>
    %202 = arith.mulf %201, %200 : vector<16x128xf32>
    %203 = arith.addf %197, %202 : vector<16x128xf32>
    %cst_98 = arith.constant dense<0.000000e+00> : vector<24x128xf32>
    %204 = tpu.matmul %0, %175, %cst_98 {dimension_numbers = #tpu.dot_dimension_numbers<[1], [0], [0], [1], [0, 0, 1, 1], [], []>} : vector<24x16xf32>, vector<16x128xf32>, vector<24x128xf32> -> vector<24x128xf32>
    %cst_99 = arith.constant dense<0.000000e+00> : vector<24x128xf32>
    %205 = tpu.matmul %1, %203, %cst_99 {dimension_numbers = #tpu.dot_dimension_numbers<[1], [0], [0], [1], [0, 0, 1, 1], [], []>} : vector<24x16xf32>, vector<16x128xf32>, vector<24x128xf32> -> vector<24x128xf32>
    %206 = arith.addf %204, %205 : vector<24x128xf32>
    %c23_i32_100 = arith.constant 23 : i32
    %207 = tpu.dynamic_rotate %206 by %c23_i32_100 dim 0 : vector<24x128xf32>, i32 -> vector<24x128xf32>
    %c127_i32_101 = arith.constant 127 : i32
    %208 = tpu.dynamic_rotate %206 by %c127_i32_101 dim 1 : vector<24x128xf32>, i32 -> vector<24x128xf32>
    %c127_i32_102 = arith.constant 127 : i32
    %209 = tpu.dynamic_rotate %207 by %c127_i32_102 dim 1 : vector<24x128xf32>, i32 -> vector<24x128xf32>
    %c1_i32_103 = arith.constant 1 : i32
    %210 = tpu.dynamic_rotate %207 by %c1_i32_103 dim 1 : vector<24x128xf32>, i32 -> vector<24x128xf32>
    %211 = arith.subf %206, %208 : vector<24x128xf32>
    %212 = arith.subf %206, %207 : vector<24x128xf32>
    %213 = arith.subf %206, %209 : vector<24x128xf32>
    %214 = arith.subf %206, %210 : vector<24x128xf32>
    %215 = arith.mulf %211, %211 : vector<24x128xf32>
    %216 = arith.addf %141, %215 : vector<24x128xf32>
    %217 = arith.mulf %212, %212 : vector<24x128xf32>
    %218 = arith.addf %143, %217 : vector<24x128xf32>
    %219 = arith.mulf %213, %213 : vector<24x128xf32>
    %220 = arith.addf %145, %219 : vector<24x128xf32>
    %221 = arith.mulf %214, %214 : vector<24x128xf32>
    %222 = arith.addf %147, %221 : vector<24x128xf32>
    %223 = vector.extract_strided_slice %216 {offsets = [0, 0], sizes = [16, 128], strides = [1, 1]} : vector<24x128xf32> to vector<16x128xf32>
    %224 = math.sqrt %223 : vector<16x128xf32>
    %c0_104 = arith.constant 0 : index
    %c0_105 = arith.constant 0 : index
    %c0_106 = arith.constant 0 : index
    %225 = vector.load %arg5[%c0_104, %c0_105, %c0_106] : memref<4x16x128xf32, #tpu.memory_space<vmem>>, vector<1x16x128xf32>
    %226 = vector.shape_cast %225 : vector<1x16x128xf32> to vector<16x128xf32>
    %227 = vector.shape_cast %224 : vector<16x128xf32> to vector<1x16x128xf32>
    tpu.vector_store %arg5[%c0_104, %c0_105, %c0_106], %227 {strides = array<i32>} : memref<4x16x128xf32, #tpu.memory_space<vmem>>, vector<1x16x128xf32>,
    %228 = vector.extract_strided_slice %218 {offsets = [0, 0], sizes = [16, 128], strides = [1, 1]} : vector<24x128xf32> to vector<16x128xf32>
    %229 = math.sqrt %228 : vector<16x128xf32>
    %c1_107 = arith.constant 1 : index
    %c0_108 = arith.constant 0 : index
    %c0_109 = arith.constant 0 : index
    %230 = vector.load %arg5[%c1_107, %c0_108, %c0_109] : memref<4x16x128xf32, #tpu.memory_space<vmem>>, vector<1x16x128xf32>
    %231 = vector.shape_cast %230 : vector<1x16x128xf32> to vector<16x128xf32>
    %232 = vector.shape_cast %229 : vector<16x128xf32> to vector<1x16x128xf32>
    tpu.vector_store %arg5[%c1_107, %c0_108, %c0_109], %232 {strides = array<i32>} : memref<4x16x128xf32, #tpu.memory_space<vmem>>, vector<1x16x128xf32>,
    %233 = vector.extract_strided_slice %220 {offsets = [0, 0], sizes = [16, 128], strides = [1, 1]} : vector<24x128xf32> to vector<16x128xf32>
    %234 = math.sqrt %233 : vector<16x128xf32>
    %c2_110 = arith.constant 2 : index
    %c0_111 = arith.constant 0 : index
    %c0_112 = arith.constant 0 : index
    %235 = vector.load %arg5[%c2_110, %c0_111, %c0_112] : memref<4x16x128xf32, #tpu.memory_space<vmem>>, vector<1x16x128xf32>
    %236 = vector.shape_cast %235 : vector<1x16x128xf32> to vector<16x128xf32>
    %237 = vector.shape_cast %234 : vector<16x128xf32> to vector<1x16x128xf32>
    tpu.vector_store %arg5[%c2_110, %c0_111, %c0_112], %237 {strides = array<i32>} : memref<4x16x128xf32, #tpu.memory_space<vmem>>, vector<1x16x128xf32>,
    %238 = vector.extract_strided_slice %222 {offsets = [0, 0], sizes = [16, 128], strides = [1, 1]} : vector<24x128xf32> to vector<16x128xf32>
    %239 = math.sqrt %238 : vector<16x128xf32>
    %c3 = arith.constant 3 : index
    %c0_113 = arith.constant 0 : index
    %c0_114 = arith.constant 0 : index
    %240 = vector.load %arg5[%c3, %c0_113, %c0_114] : memref<4x16x128xf32, #tpu.memory_space<vmem>>, vector<1x16x128xf32>
    %241 = vector.shape_cast %240 : vector<1x16x128xf32> to vector<16x128xf32>
    %242 = vector.shape_cast %239 : vector<16x128xf32> to vector<1x16x128xf32>
    tpu.vector_store %arg5[%c3, %c0_113, %c0_114], %242 {strides = array<i32>} : memref<4x16x128xf32, #tpu.memory_space<vmem>>, vector<1x16x128xf32>,
    return
  }
  func.func @transform_0(%arg0: i32) -> (i32, i32) {
    %c0_i32 = arith.constant 0 : i32
    %c0_i32_0 = arith.constant 0 : i32
    %c0_i32_1 = arith.constant 0 : i32
    return %c0_i32, %c0_i32_0 : i32, i32
  }
  func.func @transform_1(%arg0: i32) -> (i32, i32) {
    %c0_i32 = arith.constant 0 : i32
    %c0_i32_0 = arith.constant 0 : i32
    %c0_i32_1 = arith.constant 0 : i32
    return %c0_i32, %c0_i32_0 : i32, i32
  }
  func.func @transform_2(%arg0: i32) -> (i32, i32, i32) {
    %c0_i32 = arith.constant 0 : i32
    %c0_i32_0 = arith.constant 0 : i32
    %c0_i32_1 = arith.constant 0 : i32
    return %c0_i32, %arg0, %c0_i32_0 : i32, i32, i32
  }
  func.func @transform_3(%arg0: i32) -> (i32, i32, i32) {
    %c1_i32 = arith.constant 1 : i32
    %0 = arith.addi %arg0, %c1_i32 : i32
    %c1_i32_0 = arith.constant 1 : i32
    %1 = arith.muli %0, %c1_i32_0 : i32
    %c0_i32 = arith.constant 0 : i32
    %c0_i32_1 = arith.constant 0 : i32
    %c0_i32_2 = arith.constant 0 : i32
    return %c0_i32, %1, %c0_i32_1 : i32, i32, i32
  }
  func.func @transform_4(%arg0: i32) -> (i32, i32, i32) {
    %c0_i32 = arith.constant 0 : i32
    %c0_i32_0 = arith.constant 0 : i32
    %c0_i32_1 = arith.constant 0 : i32
    return %c0_i32, %arg0, %c0_i32_0 : i32, i32, i32
  }
}

</mosaic_0001>

<llo_original>
// kernel: tpu_custom_call.1
$region0: #{tpu_custom_call.1}
  #allocation0 [shape = 'u32[]', space=smem, size = 0x4, offset = 0x4, fixed_abs, tag = 'smem constant byte address 0x4 - core index']
  #allocation1 [shape = 'u32[144,128]{1,0:T(1,128)}', space=vmem, size = 0x12000, scoped, tag = 'internal scratch']
  #allocation8 [shape = 's32[]', space=sflag, size = 0x4, offset = 0, fixed_abs, tag = 'sflag constant byte address 0x0 - dummy sync flag']
  #allocation10 [shape = 's32[]', space=sflag, size = 0x4, offset = 0, fixed_abs, tag = 'sflag constant byte address 0x0 - dummy sync flag']
  %s0 = inlined_call_operand.vmem [shape: f32[24,16], index: 0, kind: input, shape index: {}]
  %s1 = inlined_call_operand.vmem [shape: f32[24,16], index: 1, kind: input, shape index: {}]
  %s2 = inlined_call_operand.hbm [shape: f32[3,32,128], index: 2, kind: input, shape index: {}]
  %s3 = inlined_call_operand.hbm [shape: f32[3,32,128], index: 3, kind: input, shape index: {}]
  %s4 = inlined_call_operand.hbm [shape: f32[4,16,128], index: 4, kind: output, shape index: {}]
  %s5 = sld [smem:[#allocation0]]
  $region34: #{tpu_custom_call.1} parent=0
    _
  %s7 = ssub.s32 1, %s5
  %s8 = scalar_select 0, %s7, %s5
  $region1: #{tpu_custom_call.1} parent=0
    #allocation2 [shape = 'u8[24576]{0}', space=vmem, size = 0x6000, scoped, tag = 'input window, operand 2, single buffered']
    #allocation3 [shape = 's32[1]{0}', space=sflag, size = 0x4, scoped, tag = 'scoped memory for tpu_custom_call.1']
    #allocation4 [shape = 's32[1]{0}', space=sflag, size = 0x4, scoped, tag = 'scoped memory for tpu_custom_call.1']
    #allocation5 [shape = 'u8[24576]{0}', space=vmem, size = 0x6000, scoped, tag = 'input window, operand 3, single buffered']
    #allocation6 [shape = 's32[1]{0}', space=sflag, size = 0x4, scoped, tag = 'scoped memory for tpu_custom_call.1']
    #allocation7 [shape = 'u8[32768]{0}', space=vmem, size = 0x8000, scoped, tag = 'output window, operand 0, single buffered']
    %9 = vsyncpa [#allocation3], 0
    %10 = vsyncpa [#allocation6], 0
    %11 = vsyncpa [#allocation4], 0
    // Predicated region
    $region2: #{tpu_custom_call.1} parent=1 // pred_check
      _
    $region3: #{tpu_custom_call.1} parent=1 // pred_check_branch
      %13 = sbr.rel (0) target = $region5
    $region4: #{tpu_custom_call.1} parent=1 // pred_region
      _
    $region5: #{tpu_custom_call.1} parent=1 // pred_fallthru
      _
    // Predicated region
    $region6: #{tpu_custom_call.1} parent=1 // pred_check
      _
    $region7: #{tpu_custom_call.1} parent=1 // pred_check_branch
      %15 = sbr.rel (0) target = $region9
    $region8: #{tpu_custom_call.1} parent=1 // pred_region
      _
    $region9: #{tpu_custom_call.1} parent=1 // pred_fallthru
      _
    // Predicated region
    $region10: #{tpu_custom_call.1} parent=1 // pred_check
      _
    $region11: #{tpu_custom_call.1} parent=1 // pred_check_branch
      %17 = sbr.rel (0) target = $region13
    $region12: #{tpu_custom_call.1} parent=1 // pred_region
      #allocation9 [shape = 'u32[6]{0}', space=smem, size = 0x18, scoped, tag = 'DMA stride descriptor']
      %s19 = ssub.s32 768, 768
      %20 = vsyncadd [#allocation3], %s19
      %s22 = sshll.u32 1, 14
      %s23 = sxor.u32 4294967295, %s22
      %s25 = sld [smem:[#allocation0]]
      %s26 = sadd.s32 2, %s25
      %s28 = sshll.u32 7, 26
      %s29 = sxor.u32 4294967295, %s28
      %s30 = sand.u32 0, %s29
      %s31 = sshll.u32 %s26, 26
      %s32 = sor.u32 %s30, %s31
      %s33 = sshll.u32 [#allocation2], 4
      %s34 = int_to_ptr.vmem [resolvable:$true] %s33
      %40 = sst [smem:[#allocation9]] 512
      %s41 = scalar_lea.smem [#allocation9], 1
      %42 = sst [smem:[%s41]] 256
      %s43 = scalar_lea.smem [#allocation9], 2
      %44 = sst [smem:[%s43]] 2
      %s45 = scalar_lea.smem [#allocation9], 3
      %46 = sst [smem:[%s45]] 128
      %s47 = scalar_lea.smem [#allocation9], 4
      %48 = sst [smem:[%s47]] 128
      %s49 = scalar_lea.smem [#allocation9], 5
      %50 = sst [smem:[%s49]] 8
      %52 = dma.general %s2, 768, %s34, [#allocation3], [#allocation8], [#allocation9], %s32, 0
    $region13: #{tpu_custom_call.1} parent=1 // pred_fallthru
      _
    // Predicated region
    $region14: #{tpu_custom_call.1} parent=1 // pred_check
      _
    $region15: #{tpu_custom_call.1} parent=1 // pred_check_branch
      %54 = sbr.rel (0) target = $region17
    $region16: #{tpu_custom_call.1} parent=1 // pred_region
      #allocation11 [shape = 'u32[6]{0}', space=smem, size = 0x18, scoped, tag = 'DMA stride descriptor']
      %s55 = sadd.s32 0, 1
      %s56 = smul.u32 2, %s55
      %s58 = ssub.s32 768, 768
      %59 = vsyncadd [#allocation6], %s58
      %s60 = smul.addr %s56, 128
      %s61 = scalar_lea.hbm %s3, %s60
      %s63 = sshll.u32 1, 14
      %s64 = sxor.u32 4294967295, %s63
      %s66 = sld [smem:[#allocation0]]
      %s67 = sadd.s32 2, %s66
      %s69 = sshll.u32 7, 26
      %s70 = sxor.u32 4294967295, %s69
      %s71 = sand.u32 0, %s70
      %s72 = sshll.u32 %s67, 26
      %s73 = sor.u32 %s71, %s72
      %s74 = sshll.u32 [#allocation5], 4
      %s75 = int_to_ptr.vmem [resolvable:$true] %s74
      %81 = sst [smem:[#allocation11]] 512
      %s82 = scalar_lea.smem [#allocation11], 1
      %83 = sst [smem:[%s82]] 256
      %s84 = scalar_lea.smem [#allocation11], 2
      %85 = sst [smem:[%s84]] 2
      %s86 = scalar_lea.smem [#allocation11], 3
      %87 = sst [smem:[%s86]] 128
      %s88 = scalar_lea.smem [#allocation11], 4
      %89 = sst [smem:[%s88]] 128
      %s90 = scalar_lea.smem [#allocation11], 5
      %91 = sst [smem:[%s90]] 8
      %93 = dma.general %s61, 768, %s75, [#allocation6], [#allocation10], [#allocation11], %s73, 0
    $region17: #{tpu_custom_call.1} parent=1 // pred_fallthru
      _
    // Predicated region
    $region18: #{tpu_custom_call.1} parent=1 // pred_check
      _
    $region19: #{tpu_custom_call.1} parent=1 // pred_check_branch
      %95 = sbr.rel (0) target = $region21
    $region20: #{tpu_custom_call.1} parent=1 // pred_region
      %96 = dma.done [#allocation3], 768
    $region21: #{tpu_custom_call.1} parent=1 // pred_fallthru
      _
    // Predicated region
    $region22: #{tpu_custom_call.1} parent=1 // pred_check
      _
    $region23: #{tpu_custom_call.1} parent=1 // pred_check_branch
      %98 = sbr.rel (0) target = $region25
    $region24: #{tpu_custom_call.1} parent=1 // pred_region
      %99 = dma.done [#allocation6], 768
    $region25: #{tpu_custom_call.1} parent=1 // pred_fallthru
      _
    %s100 = sadd.s32 0, 1
    %s101 = smul.u32 2, %s100
    %v102 = vld [vmem:[%s0] sm:$0xff]
    %v103 = vld [vmem:[%s0 + $0x8] sm:$0xff]
    %v104 = vld [vmem:[%s0 + $0x10] sm:$0xff]
    %v105 = vld [vmem:[%s1] sm:$0xff]
    %v106 = vld [vmem:[%s1 + $0x8] sm:$0xff]
    %v107 = vld [vmem:[%s1 + $0x10] sm:$0xff]
    %v108 = vld [vmem:[#allocation2] sm:$0xff]
    %v109 = vld [vmem:[#allocation2 + $0x8] sm:$0xff]
    %110 = vrot.lane.b32.xlu0 %v108, 124
    %v111 = vpop.permute.xlu0 %110
    %112 = vrot.lane.b32.xlu0 %v109, 124
    %v113 = vpop.permute.xlu0 %112
    %v114 = vmul.f32 %v111, 0.39894348
    %v115 = vmul.f32 %v113, 0.39894348
    %116 = vrot.lane.b32.xlu0 %v108, 120
    %v117 = vpop.permute.xlu0 %116
    %118 = vrot.lane.b32.xlu0 %v109, 120
    %v119 = vpop.permute.xlu0 %118
    %v120 = vadd.f32 %v108, %v117
    %v121 = vadd.f32 %v109, %v119
    %v122 = vmul.f32 %v120, 0.00013383062
    %v123 = vmul.f32 %v121, 0.00013383062
    %v124 = vadd.f32 %v114, %v122
    %v125 = vadd.f32 %v115, %v123
    %126 = vrot.lane.b32.xlu0 %v108, 127
    %v127 = vpop.permute.xlu0 %126
    %128 = vrot.lane.b32.xlu0 %v109, 127
    %v129 = vpop.permute.xlu0 %128
    %130 = vrot.lane.b32.xlu0 %v108, 121
    %v131 = vpop.permute.xlu0 %130
    %132 = vrot.lane.b32.xlu0 %v109, 121
    %v133 = vpop.permute.xlu0 %132
    %v134 = vadd.f32 %v127, %v131
    %v135 = vadd.f32 %v129, %v133
    %v136 = vmul.f32 %v134, 0.0044318615
    %v137 = vmul.f32 %v135, 0.0044318615
    %v138 = vadd.f32 %v124, %v136
    %v139 = vadd.f32 %v125, %v137
    %140 = vrot.lane.b32.xlu0 %v108, 126
    %v141 = vpop.permute.xlu0 %140
    %142 = vrot.lane.b32.xlu0 %v109, 126
    %v143 = vpop.permute.xlu0 %142
    %144 = vrot.lane.b32.xlu0 %v108, 122
    %v145 = vpop.permute.xlu0 %144
    %146 = vrot.lane.b32.xlu0 %v109, 122
    %v147 = vpop.permute.xlu0 %146
    %v148 = vadd.f32 %v141, %v145
    %v149 = vadd.f32 %v143, %v147
    %v150 = vmul.f32 %v148, 0.053991128
    %v151 = vmul.f32 %v149, 0.053991128
    %v152 = vadd.f32 %v138, %v150
    %v153 = vadd.f32 %v139, %v151
    %154 = vrot.lane.b32.xlu0 %v108, 125
    %v155 = vpop.permute.xlu0 %154
    %156 = vrot.lane.b32.xlu0 %v109, 125
    %v157 = vpop.permute.xlu0 %156
    %158 = vrot.lane.b32.xlu0 %v108, 123
    %v159 = vpop.permute.xlu0 %158
    %160 = vrot.lane.b32.xlu0 %v109, 123
    %v161 = vpop.permute.xlu0 %160
    %v162 = vadd.f32 %v155, %v159
    %v163 = vadd.f32 %v157, %v161
    %v164 = vmul.f32 %v162, 0.24197145
    %v165 = vmul.f32 %v163, 0.24197145
    %v166 = vadd.f32 %v152, %v164
    %v167 = vadd.f32 %v153, %v165
    %v168 = vld [vmem:[#allocation5] sm:$0xff]
    %v169 = vld [vmem:[#allocation5 + $0x8] sm:$0xff]
    %170 = vrot.lane.b32.xlu0 %v168, 124
    %v171 = vpop.permute.xlu0 %170
    %172 = vrot.lane.b32.xlu0 %v169, 124
    %v173 = vpop.permute.xlu0 %172
    %v174 = vmul.f32 %v171, 0.39894348
    %v175 = vmul.f32 %v173, 0.39894348
    %176 = vrot.lane.b32.xlu0 %v168, 120
    %v177 = vpop.permute.xlu0 %176
    %178 = vrot.lane.b32.xlu0 %v169, 120
    %v179 = vpop.permute.xlu0 %178
    %v180 = vadd.f32 %v168, %v177
    %v181 = vadd.f32 %v169, %v179
    %v182 = vmul.f32 %v180, 0.00013383062
    %v183 = vmul.f32 %v181, 0.00013383062
    %v184 = vadd.f32 %v174, %v182
    %v185 = vadd.f32 %v175, %v183
    %186 = vrot.lane.b32.xlu0 %v168, 127
    %v187 = vpop.permute.xlu0 %186
    %188 = vrot.lane.b32.xlu0 %v169, 127
    %v189 = vpop.permute.xlu0 %188
    %190 = vrot.lane.b32.xlu0 %v168, 121
    %v191 = vpop.permute.xlu0 %190
    %192 = vrot.lane.b32.xlu0 %v169, 121
    %v193 = vpop.permute.xlu0 %192
    %v194 = vadd.f32 %v187, %v191
    %v195 = vadd.f32 %v189, %v193
    %v196 = vmul.f32 %v194, 0.0044318615
    %v197 = vmul.f32 %v195, 0.0044318615
    %v198 = vadd.f32 %v184, %v196
    %v199 = vadd.f32 %v185, %v197
    %200 = vrot.lane.b32.xlu0 %v168, 126
    %v201 = vpop.permute.xlu0 %200
    %202 = vrot.lane.b32.xlu0 %v169, 126
    %v203 = vpop.permute.xlu0 %202
    %204 = vrot.lane.b32.xlu0 %v168, 122
    %v205 = vpop.permute.xlu0 %204
    %206 = vrot.lane.b32.xlu0 %v169, 122
    %v207 = vpop.permute.xlu0 %206
    %v208 = vadd.f32 %v201, %v205
    %v209 = vadd.f32 %v203, %v207
    %v210 = vmul.f32 %v208, 0.053991128
    %v211 = vmul.f32 %v209, 0.053991128
    %v212 = vadd.f32 %v198, %v210
    %v213 = vadd.f32 %v199, %v211
    %214 = vrot.lane.b32.xlu0 %v168, 125
    %v215 = vpop.permute.xlu0 %214
    %216 = vrot.lane.b32.xlu0 %v169, 125
    %v217 = vpop.permute.xlu0 %216
    %218 = vrot.lane.b32.xlu0 %v168, 123
    %v219 = vpop.permute.xlu0 %218
    %220 = vrot.lane.b32.xlu0 %v169, 123
    %v221 = vpop.permute.xlu0 %220
    %v222 = vadd.f32 %v215, %v219
    %v223 = vadd.f32 %v217, %v221
    %v224 = vmul.f32 %v222, 0.24197145
    %v225 = vmul.f32 %v223, 0.24197145
    %v226 = vadd.f32 %v212, %v224
    %v227 = vadd.f32 %v213, %v225
    %vm228 = vcmask 130048
    %v230 = vsel %vm228, %v105, 0
    %v233 = vsel %vm228, %v106, 0
    %v236 = vsel %vm228, %v107, 0
    %238 = vmatprep.subr.mxu0 0.0
    %239 = vmatpush1.msra.mxu0 %v226
    %240 = vmatprep.subr.mxu0 0.0
    %241 = vmatpush1.msra.mxu0 %v227
    %242 = vmatprep.subr.mxu0 0.0
    %243 = vmatpush1.msra.mxu0 0.0
    %244 = vmatprep.subr.mxu0 0.0
    %245 = vmatpush1.msra.mxu0 0.0
    %246 = vmatprep.subr.mxu0 0.0
    %247 = vmatpush1.msra.mxu0 0.0
    %248 = vmatprep.subr.mxu0 0.0
    %249 = vmatpush1.msra.mxu0 0.0
    %250 = vmatprep.subr.mxu0 0.0
    %251 = vmatpush1.msra.mxu0 0.0
    %252 = vmatprep.subr.mxu0 0.0
    %253 = vmatpush1.msra.mxu0 0.0
    %254 = vmatprep.subr.mxu0 0.0
    %255 = vmatpush1.msra.mxu0 0.0
    %256 = vmatprep.subr.mxu0 0.0
    %257 = vmatpush1.msra.mxu0 0.0
    %258 = vmatprep.subr.mxu0 0.0
    %259 = vmatpush1.msra.mxu0 0.0
    %260 = vmatprep.subr.mxu0 0.0
    %261 = vmatpush1.msra.mxu0 0.0
    %262 = vmatprep.subr.mxu0 0.0
    %263 = vmatpush1.msra.mxu0 0.0
    %264 = vmatprep.subr.mxu0 0.0
    %265 = vmatpush1.msra.mxu0 0.0
    %266 = vmatprep.subr.mxu0 0.0
    %267 = vmatpush1.msra.mxu0 0.0
    %268 = vmatprep.subr.mxu0 0.0
    %269 = vmatpush1.msra.mxu0 0.0
    %270 = vmatprep.subr.mxu0 0.0
    %271 = vmatpush1.msra.mxu0 0.0
    %272 = vmatprep.subr.mxu0 0.0
    %273 = vmatpush1.msra.mxu0 0.0
    %274 = vmatprep.subr.mxu0 0.0
    %275 = vmatpush1.msra.mxu0 0.0
    %276 = vmatprep.subr.mxu0 0.0
    %277 = vmatpush1.msra.mxu0 0.0
    %278 = vmatprep.subr.mxu0 0.0
    %279 = vmatpush1.msra.mxu0 0.0
    %280 = vmatprep.subr.mxu0 0.0
    %281 = vmatpush1.msra.mxu0 0.0
    %282 = vmatprep.subr.mxu0 0.0
    %283 = vmatpush1.msra.mxu0 0.0
    %284 = vmatprep.subr.mxu0 0.0
    %285 = vmatpush1.msra.mxu0 0.0
    %286 = vmatprep.subr.mxu0 0.0
    %287 = vmatpush1.msra.mxu0 0.0
    %288 = vmatprep.subr.mxu0 0.0
    %289 = vmatpush1.msra.mxu0 0.0
    %290 = vmatprep.subr.mxu0 0.0
    %291 = vmatpush1.msra.mxu0 0.0
    %292 = vmatprep.subr.mxu0 0.0
    %293 = vmatpush1.msra.mxu0 0.0
    %294 = vmatprep.subr.mxu0 0.0
    %295 = vmatpush1.msra.mxu0 0.0
    %296 = vmatprep.subr.mxu0 0.0
    %297 = vmatpush1.msra.mxu0 0.0
    %298 = vmatprep.subr.mxu0 0.0
    %299 = vmatpush1.msra.mxu0 0.0
    %300 = vmatprep.subr.mxu0 0.0
    %301 = vmatpush1.msra.mxu0 0.0
    %302 = vmatprep.mubr.f32.mxu0 0.0
    %303 = vmatmul.mubr.f32.gmra.mrb[0].mxu0 %v230
    %v304 = vpop.f32.mrb[0].mxu0
    %v305 = vadd.f32 0.0, %v304
    %v306 = vpop.f32.mrb[0].mxu0
    %307 = vmatprep.mubr.f32.mxu0 0.0
    %308 = vmatmul.mubr.f32.gmra.mrb[0].mxu0 %v233
    %v309 = vpop.f32.mrb[0].mxu0
    %v310 = vadd.f32 0.0, %v309
    %v311 = vpop.f32.mrb[0].mxu0
    %312 = vmatprep.mubr.f32.mxu0 0.0
    %313 = vmatmul.mubr.f32.gmra.mrb[0].mxu0 %v236
    %v314 = vpop.f32.mrb[0].mxu0
    %v315 = vadd.f32 0.0, %v314
    %v316 = vpop.f32.mrb[0].mxu0
    %317 = vdwg.mxu0
    %v319 = vsel %vm228, %v102, 0
    %v322 = vsel %vm228, %v103, 0
    %v325 = vsel %vm228, %v104, 0
    %327 = vmatprep.subr.mxu0 0.0
    %328 = vmatpush1.msra.mxu0 %v166
    %329 = vmatprep.subr.mxu0 0.0
    %330 = vmatpush1.msra.mxu0 %v167
    %331 = vmatprep.subr.mxu0 0.0
    %332 = vmatpush1.msra.mxu0 0.0
    %333 = vmatprep.subr.mxu0 0.0
    %334 = vmatpush1.msra.mxu0 0.0
    %335 = vmatprep.subr.mxu0 0.0
    %336 = vmatpush1.msra.mxu0 0.0
    %337 = vmatprep.subr.mxu0 0.0
    %338 = vmatpush1.msra.mxu0 0.0
    %339 = vmatprep.subr.mxu0 0.0
    %340 = vmatpush1.msra.mxu0 0.0
    %341 = vmatprep.subr.mxu0 0.0
    %342 = vmatpush1.msra.mxu0 0.0
    %343 = vmatprep.subr.mxu0 0.0
    %344 = vmatpush1.msra.mxu0 0.0
    %345 = vmatprep.subr.mxu0 0.0
    %346 = vmatpush1.msra.mxu0 0.0
    %347 = vmatprep.subr.mxu0 0.0
    %348 = vmatpush1.msra.mxu0 0.0
    %349 = vmatprep.subr.mxu0 0.0
    %350 = vmatpush1.msra.mxu0 0.0
    %351 = vmatprep.subr.mxu0 0.0
    %352 = vmatpush1.msra.mxu0 0.0
    %353 = vmatprep.subr.mxu0 0.0
    %354 = vmatpush1.msra.mxu0 0.0
    %355 = vmatprep.subr.mxu0 0.0
    %356 = vmatpush1.msra.mxu0 0.0
    %357 = vmatprep.subr.mxu0 0.0
    %358 = vmatpush1.msra.mxu0 0.0
    %359 = vmatprep.subr.mxu0 0.0
    %360 = vmatpush1.msra.mxu0 0.0
    %361 = vmatprep.subr.mxu0 0.0
    %362 = vmatpush1.msra.mxu0 0.0
    %363 = vmatprep.subr.mxu0 0.0
    %364 = vmatpush1.msra.mxu0 0.0
    %365 = vmatprep.subr.mxu0 0.0
    %366 = vmatpush1.msra.mxu0 0.0
    %367 = vmatprep.subr.mxu0 0.0
    %368 = vmatpush1.msra.mxu0 0.0
    %369 = vmatprep.subr.mxu0 0.0
    %370 = vmatpush1.msra.mxu0 0.0
    %371 = vmatprep.subr.mxu0 0.0
    %372 = vmatpush1.msra.mxu0 0.0
    %373 = vmatprep.subr.mxu0 0.0
    %374 = vmatpush1.msra.mxu0 0.0
    %375 = vmatprep.subr.mxu0 0.0
    %376 = vmatpush1.msra.mxu0 0.0
    %377 = vmatprep.subr.mxu0 0.0
    %378 = vmatpush1.msra.mxu0 0.0
    %379 = vmatprep.subr.mxu0 0.0
    %380 = vmatpush1.msra.mxu0 0.0
    %381 = vmatprep.subr.mxu0 0.0
    %382 = vmatpush1.msra.mxu0 0.0
    %383 = vmatprep.subr.mxu0 0.0
    %384 = vmatpush1.msra.mxu0 0.0
    %385 = vmatprep.subr.mxu0 0.0
    %386 = vmatpush1.msra.mxu0 0.0
    %387 = vmatprep.subr.mxu0 0.0
    %388 = vmatpush1.msra.mxu0 0.0
    %389 = vmatprep.subr.mxu0 0.0
    %390 = vmatpush1.msra.mxu0 0.0
    %391 = vmatprep.mubr.f32.mxu0 0.0
    %392 = vmatmul.mubr.f32.gmra.mrb[0].mxu0 %v319
    %v393 = vpop.f32.mrb[0].mxu0
    %v394 = vadd.f32 %v305, %v393
    %v395 = vpop.f32.mrb[0].mxu0
    %396 = vmatprep.mubr.f32.mxu0 0.0
    %397 = vmatmul.mubr.f32.gmra.mrb[0].mxu0 %v322
    %v398 = vpop.f32.mrb[0].mxu0
    %v399 = vadd.f32 %v310, %v398
    %v400 = vpop.f32.mrb[0].mxu0
    %401 = vmatprep.mubr.f32.mxu0 0.0
    %402 = vmatmul.mubr.f32.gmra.mrb[0].mxu0 %v325
    %v403 = vpop.f32.mrb[0].mxu0
    %v404 = vadd.f32 %v315, %v403
    %v405 = vpop.f32.mrb[0].mxu0
    %406 = vdwg.mxu0
    %v407 = vrot.slane %v394, 1
    %v408 = vrot.slane %v399, 1
    %v409 = vrot.slane %v404, 1
    %v410 = vlaneseq
    %v411 = vshrl.u32 %v410, 7
    %vm412 = vcmp.lt.s32.totalorder %v411, 7
    %v413 = vsel %vm412, %v408, %v409
    %v414 = vsel %vm412, %v407, %v408
    %415 = vrot.lane.b32.xlu0 %v394, 127
    %v416 = vpop.permute.xlu0 %415
    %417 = vrot.lane.b32.xlu0 %v399, 127
    %v418 = vpop.permute.xlu0 %417
    %419 = vrot.lane.b32.xlu0 %v414, 127
    %v420 = vpop.permute.xlu0 %419
    %421 = vrot.lane.b32.xlu0 %v413, 127
    %v422 = vpop.permute.xlu0 %421
    %423 = vrot.lane.b32.xlu0 %v414, 1
    %v424 = vpop.permute.xlu0 %423
    %425 = vrot.lane.b32.xlu0 %v413, 1
    %v426 = vpop.permute.xlu0 %425
    %v427 = vsub.f32 %v394, %v416
    %v428 = vsub.f32 %v399, %v418
    %v429 = vsub.f32 %v394, %v414
    %v430 = vsub.f32 %v399, %v413
    %v431 = vsub.f32 %v394, %v420
    %v432 = vsub.f32 %v399, %v422
    %v433 = vsub.f32 %v394, %v424
    %v434 = vsub.f32 %v399, %v426
    %v435 = vmul.f32 %v427, %v427
    %v436 = vmul.f32 %v428, %v428
    %v437 = vmul.f32 %v429, %v429
    %v438 = vmul.f32 %v430, %v430
    %v439 = vmul.f32 %v431, %v431
    %v440 = vmul.f32 %v432, %v432
    %v441 = vmul.f32 %v433, %v433
    %v442 = vmul.f32 %v434, %v434
    %s443 = scalar_lea.vmem [#allocation2], 16
    %v444 = vld [vmem:[%s443] sm:$0xff]
    %v445 = vld [vmem:[%s443 + $0x8] sm:$0xff]
    %446 = vrot.lane.b32.xlu0 %v444, 124
    %v447 = vpop.permute.xlu0 %446
    %448 = vrot.lane.b32.xlu0 %v445, 124
    %v449 = vpop.permute.xlu0 %448
    %v450 = vmul.f32 %v447, 0.39894348
    %v451 = vmul.f32 %v449, 0.39894348
    %452 = vrot.lane.b32.xlu0 %v444, 120
    %v453 = vpop.permute.xlu0 %452
    %454 = vrot.lane.b32.xlu0 %v445, 120
    %v455 = vpop.permute.xlu0 %454
    %v456 = vadd.f32 %v444, %v453
    %v457 = vadd.f32 %v445, %v455
    %v458 = vmul.f32 %v456, 0.00013383062
    %v459 = vmul.f32 %v457, 0.00013383062
    %v460 = vadd.f32 %v450, %v458
    %v461 = vadd.f32 %v451, %v459
    %462 = vrot.lane.b32.xlu0 %v444, 127
    %v463 = vpop.permute.xlu0 %462
    %464 = vrot.lane.b32.xlu0 %v445, 127
    %v465 = vpop.permute.xlu0 %464
    %466 = vrot.lane.b32.xlu0 %v444, 121
    %v467 = vpop.permute.xlu0 %466
    %468 = vrot.lane.b32.xlu0 %v445, 121
    %v469 = vpop.permute.xlu0 %468
    %v470 = vadd.f32 %v463, %v467
    %v471 = vadd.f32 %v465, %v469
    %v472 = vmul.f32 %v470, 0.0044318615
    %v473 = vmul.f32 %v471, 0.0044318615
    %v474 = vadd.f32 %v460, %v472
    %v475 = vadd.f32 %v461, %v473
    %476 = vrot.lane.b32.xlu0 %v444, 126
    %v477 = vpop.permute.xlu0 %476
    %478 = vrot.lane.b32.xlu0 %v445, 126
    %v479 = vpop.permute.xlu0 %478
    %480 = vrot.lane.b32.xlu0 %v444, 122
    %v481 = vpop.permute.xlu0 %480
    %482 = vrot.lane.b32.xlu0 %v445, 122
    %v483 = vpop.permute.xlu0 %482
    %v484 = vadd.f32 %v477, %v481
    %v485 = vadd.f32 %v479, %v483
    %v486 = vmul.f32 %v484, 0.053991128
    %v487 = vmul.f32 %v485, 0.053991128
    %v488 = vadd.f32 %v474, %v486
    %v489 = vadd.f32 %v475, %v487
    %490 = vrot.lane.b32.xlu0 %v444, 125
    %v491 = vpop.permute.xlu0 %490
    %492 = vrot.lane.b32.xlu0 %v445, 125
    %v493 = vpop.permute.xlu0 %492
    %494 = vrot.lane.b32.xlu0 %v444, 123
    %v495 = vpop.permute.xlu0 %494
    %496 = vrot.lane.b32.xlu0 %v445, 123
    %v497 = vpop.permute.xlu0 %496
    %v498 = vadd.f32 %v491, %v495
    %v499 = vadd.f32 %v493, %v497
    %v500 = vmul.f32 %v498, 0.24197145
    %v501 = vmul.f32 %v499, 0.24197145
    %v502 = vadd.f32 %v488, %v500
    %v503 = vadd.f32 %v489, %v501
    %s504 = scalar_lea.vmem [#allocation5], 16
    %v505 = vld [vmem:[%s504] sm:$0xff]
    %v506 = vld [vmem:[%s504 + $0x8] sm:$0xff]
    %507 = vrot.lane.b32.xlu0 %v505, 124
    %v508 = vpop.permute.xlu0 %507
    %509 = vrot.lane.b32.xlu0 %v506, 124
    %v510 = vpop.permute.xlu0 %509
    %v511 = vmul.f32 %v508, 0.39894348
    %v512 = vmul.f32 %v510, 0.39894348
    %513 = vrot.lane.b32.xlu0 %v505, 120
    %v514 = vpop.permute.xlu0 %513
    %515 = vrot.lane.b32.xlu0 %v506, 120
    %v516 = vpop.permute.xlu0 %515
    %v517 = vadd.f32 %v505, %v514
    %v518 = vadd.f32 %v506, %v516
    %v519 = vmul.f32 %v517, 0.00013383062
    %v520 = vmul.f32 %v518, 0.00013383062
    %v521 = vadd.f32 %v511, %v519
    %v522 = vadd.f32 %v512, %v520
    %523 = vrot.lane.b32.xlu0 %v505, 127
    %v524 = vpop.permute.xlu0 %523
    %525 = vrot.lane.b32.xlu0 %v506, 127
    %v526 = vpop.permute.xlu0 %525
    %527 = vrot.lane.b32.xlu0 %v505, 121
    %v528 = vpop.permute.xlu0 %527
    %529 = vrot.lane.b32.xlu0 %v506, 121
    %v530 = vpop.permute.xlu0 %529
    %v531 = vadd.f32 %v524, %v528
    %v532 = vadd.f32 %v526, %v530
    %v533 = vmul.f32 %v531, 0.0044318615
    %v534 = vmul.f32 %v532, 0.0044318615
    %v535 = vadd.f32 %v521, %v533
    %v536 = vadd.f32 %v522, %v534
    %537 = vrot.lane.b32.xlu0 %v505, 126
    %v538 = vpop.permute.xlu0 %537
    %539 = vrot.lane.b32.xlu0 %v506, 126
    %v540 = vpop.permute.xlu0 %539
    %541 = vrot.lane.b32.xlu0 %v505, 122
    %v542 = vpop.permute.xlu0 %541
    %543 = vrot.lane.b32.xlu0 %v506, 122
    %v544 = vpop.permute.xlu0 %543
    %v545 = vadd.f32 %v538, %v542
    %v546 = vadd.f32 %v540, %v544
    %v547 = vmul.f32 %v545, 0.053991128
    %v548 = vmul.f32 %v546, 0.053991128
    %v549 = vadd.f32 %v535, %v547
    %v550 = vadd.f32 %v536, %v548
    %551 = vrot.lane.b32.xlu0 %v505, 125
    %v552 = vpop.permute.xlu0 %551
    %553 = vrot.lane.b32.xlu0 %v506, 125
    %v554 = vpop.permute.xlu0 %553
    %555 = vrot.lane.b32.xlu0 %v505, 123
    %v556 = vpop.permute.xlu0 %555
    %557 = vrot.lane.b32.xlu0 %v506, 123
    %v558 = vpop.permute.xlu0 %557
    %v559 = vadd.f32 %v552, %v556
    %v560 = vadd.f32 %v554, %v558
    %v561 = vmul.f32 %v559, 0.24197145
    %v562 = vmul.f32 %v560, 0.24197145
    %v563 = vadd.f32 %v549, %v561
    %v564 = vadd.f32 %v550, %v562
    %565 = vmatprep.subr.mxu0 0.0
    %566 = vmatpush1.msra.mxu0 %v563
    %567 = vmatprep.subr.mxu0 0.0
    %568 = vmatpush1.msra.mxu0 %v564
    %569 = vmatprep.subr.mxu0 0.0
    %570 = vmatpush1.msra.mxu0 0.0
    %571 = vmatprep.subr.mxu0 0.0
    %572 = vmatpush1.msra.mxu0 0.0
    %573 = vmatprep.subr.mxu0 0.0
    %574 = vmatpush1.msra.mxu0 0.0
    %575 = vmatprep.subr.mxu0 0.0
    %576 = vmatpush1.msra.mxu0 0.0
    %577 = vmatprep.subr.mxu0 0.0
    %578 = vmatpush1.msra.mxu0 0.0
    %579 = vmatprep.subr.mxu0 0.0
    %580 = vmatpush1.msra.mxu0 0.0
    %581 = vmatprep.subr.mxu0 0.0
    %582 = vmatpush1.msra.mxu0 0.0
    %583 = vmatprep.subr.mxu0 0.0
    %584 = vmatpush1.msra.mxu0 0.0
    %585 = vmatprep.subr.mxu0 0.0
    %586 = vmatpush1.msra.mxu0 0.0
    %587 = vmatprep.subr.mxu0 0.0
    %588 = vmatpush1.msra.mxu0 0.0
    %589 = vmatprep.subr.mxu0 0.0
    %590 = vmatpush1.msra.mxu0 0.0
    %591 = vmatprep.subr.mxu0 0.0
    %592 = vmatpush1.msra.mxu0 0.0
    %593 = vmatprep.subr.mxu0 0.0
    %594 = vmatpush1.msra.mxu0 0.0
    %595 = vmatprep.subr.mxu0 0.0
    %596 = vmatpush1.msra.mxu0 0.0
    %597 = vmatprep.subr.mxu0 0.0
    %598 = vmatpush1.msra.mxu0 0.0
    %599 = vmatprep.subr.mxu0 0.0
    %600 = vmatpush1.msra.mxu0 0.0
    %601 = vmatprep.subr.mxu0 0.0
    %602 = vmatpush1.msra.mxu0 0.0
    %603 = vmatprep.subr.mxu0 0.0
    %604 = vmatpush1.msra.mxu0 0.0
    %605 = vmatprep.subr.mxu0 0.0
    %606 = vmatpush1.msra.mxu0 0.0
    %607 = vmatprep.subr.mxu0 0.0
    %608 = vmatpush1.msra.mxu0 0.0
    %609 = vmatprep.subr.mxu0 0.0
    %610 = vmatpush1.msra.mxu0 0.0
    %611 = vmatprep.subr.mxu0 0.0
    %612 = vmatpush1.msra.mxu0 0.0
    %613 = vmatprep.subr.mxu0 0.0
    %614 = vmatpush1.msra.mxu0 0.0
    %615 = vmatprep.subr.mxu0 0.0
    %616 = vmatpush1.msra.mxu0 0.0
    %617 = vmatprep.subr.mxu0 0.0
    %618 = vmatpush1.msra.mxu0 0.0
    %619 = vmatprep.subr.mxu0 0.0
    %620 = vmatpush1.msra.mxu0 0.0
    %621 = vmatprep.subr.mxu0 0.0
    %622 = vmatpush1.msra.mxu0 0.0
    %623 = vmatprep.subr.mxu0 0.0
    %624 = vmatpush1.msra.mxu0 0.0
    %625 = vmatprep.subr.mxu0 0.0
    %626 = vmatpush1.msra.mxu0 0.0
    %627 = vmatprep.subr.mxu0 0.0
    %628 = vmatpush1.msra.mxu0 0.0
    %629 = vmatprep.mubr.f32.mxu0 0.0
    %630 = vmatmul.mubr.f32.gmra.mrb[0].mxu0 %v230
    %v631 = vpop.f32.mrb[0].mxu0
    %v632 = vadd.f32 0.0, %v631
    %v633 = vpop.f32.mrb[0].mxu0
    %634 = vmatprep.mubr.f32.mxu0 0.0
    %635 = vmatmul.mubr.f32.gmra.mrb[0].mxu0 %v233
    %v636 = vpop.f32.mrb[0].mxu0
    %v637 = vadd.f32 0.0, %v636
    %v638 = vpop.f32.mrb[0].mxu0
    %639 = vmatprep.mubr.f32.mxu0 0.0
    %640 = vmatmul.mubr.f32.gmra.mrb[0].mxu0 %v236
    %v641 = vpop.f32.mrb[0].mxu0
    %v642 = vadd.f32 0.0, %v641
    %v643 = vpop.f32.mrb[0].mxu0
    %644 = vdwg.mxu0
    %645 = vmatprep.subr.mxu0 0.0
    %646 = vmatpush1.msra.mxu0 %v502
    %647 = vmatprep.subr.mxu0 0.0
    %648 = vmatpush1.msra.mxu0 %v503
    %649 = vmatprep.subr.mxu0 0.0
    %650 = vmatpush1.msra.mxu0 0.0
    %651 = vmatprep.subr.mxu0 0.0
    %652 = vmatpush1.msra.mxu0 0.0
    %653 = vmatprep.subr.mxu0 0.0
    %654 = vmatpush1.msra.mxu0 0.0
    %655 = vmatprep.subr.mxu0 0.0
    %656 = vmatpush1.msra.mxu0 0.0
    %657 = vmatprep.subr.mxu0 0.0
    %658 = vmatpush1.msra.mxu0 0.0
    %659 = vmatprep.subr.mxu0 0.0
    %660 = vmatpush1.msra.mxu0 0.0
    %661 = vmatprep.subr.mxu0 0.0
    %662 = vmatpush1.msra.mxu0 0.0
    %663 = vmatprep.subr.mxu0 0.0
    %664 = vmatpush1.msra.mxu0 0.0
    %665 = vmatprep.subr.mxu0 0.0
    %666 = vmatpush1.msra.mxu0 0.0
    %667 = vmatprep.subr.mxu0 0.0
    %668 = vmatpush1.msra.mxu0 0.0
    %669 = vmatprep.subr.mxu0 0.0
    %670 = vmatpush1.msra.mxu0 0.0
    %671 = vmatprep.subr.mxu0 0.0
    %672 = vmatpush1.msra.mxu0 0.0
    %673 = vmatprep.subr.mxu0 0.0
    %674 = vmatpush1.msra.mxu0 0.0
    %675 = vmatprep.subr.mxu0 0.0
    %676 = vmatpush1.msra.mxu0 0.0
    %677 = vmatprep.subr.mxu0 0.0
    %678 = vmatpush1.msra.mxu0 0.0
    %679 = vmatprep.subr.mxu0 0.0
    %680 = vmatpush1.msra.mxu0 0.0
    %681 = vmatprep.subr.mxu0 0.0
    %682 = vmatpush1.msra.mxu0 0.0
    %683 = vmatprep.subr.mxu0 0.0
    %684 = vmatpush1.msra.mxu0 0.0
    %685 = vmatprep.subr.mxu0 0.0
    %686 = vmatpush1.msra.mxu0 0.0
    %687 = vmatprep.subr.mxu0 0.0
    %688 = vmatpush1.msra.mxu0 0.0
    %689 = vmatprep.subr.mxu0 0.0
    %690 = vmatpush1.msra.mxu0 0.0
    %691 = vmatprep.subr.mxu0 0.0
    %692 = vmatpush1.msra.mxu0 0.0
    %693 = vmatprep.subr.mxu0 0.0
    %694 = vmatpush1.msra.mxu0 0.0
    %695 = vmatprep.subr.mxu0 0.0
    %696 = vmatpush1.msra.mxu0 0.0
    %697 = vmatprep.subr.mxu0 0.0
    %698 = vmatpush1.msra.mxu0 0.0
    %699 = vmatprep.subr.mxu0 0.0
    %700 = vmatpush1.msra.mxu0 0.0
    %701 = vmatprep.subr.mxu0 0.0
    %702 = vmatpush1.msra.mxu0 0.0
    %703 = vmatprep.subr.mxu0 0.0
    %704 = vmatpush1.msra.mxu0 0.0
    %705 = vmatprep.subr.mxu0 0.0
    %706 = vmatpush1.msra.mxu0 0.0
    %707 = vmatprep.subr.mxu0 0.0
    %708 = vmatpush1.msra.mxu0 0.0
    %709 = vmatprep.mubr.f32.mxu0 0.0
    %710 = vmatmul.mubr.f32.gmra.mrb[0].mxu0 %v319
    %v711 = vpop.f32.mrb[0].mxu0
    %v712 = vadd.f32 %v632, %v711
    %v713 = vpop.f32.mrb[0].mxu0
    %714 = vmatprep.mubr.f32.mxu0 0.0
    %715 = vmatmul.mubr.f32.gmra.mrb[0].mxu0 %v322
    %v716 = vpop.f32.mrb[0].mxu0
    %v717 = vadd.f32 %v637, %v716
    %v718 = vpop.f32.mrb[0].mxu0
    %719 = vmatprep.mubr.f32.mxu0 0.0
    %720 = vmatmul.mubr.f32.gmra.mrb[0].mxu0 %v325
    %v721 = vpop.f32.mrb[0].mxu0
    %v722 = vadd.f32 %v642, %v721
    %v723 = vpop.f32.mrb[0].mxu0
    %724 = vdwg.mxu0
    %v725 = vrot.slane %v712, 1
    %v726 = vrot.slane %v717, 1
    %v727 = vrot.slane %v722, 1
    %v728 = vsel %vm412, %v726, %v727
    %v729 = vsel %vm412, %v725, %v726
    %730 = vrot.lane.b32.xlu0 %v712, 127
    %v731 = vpop.permute.xlu0 %730
    %732 = vrot.lane.b32.xlu0 %v717, 127
    %v733 = vpop.permute.xlu0 %732
    %734 = vrot.lane.b32.xlu0 %v729, 127
    %v735 = vpop.permute.xlu0 %734
    %736 = vrot.lane.b32.xlu0 %v728, 127
    %v737 = vpop.permute.xlu0 %736
    %738 = vrot.lane.b32.xlu0 %v729, 1
    %v739 = vpop.permute.xlu0 %738
    %740 = vrot.lane.b32.xlu0 %v728, 1
    %v741 = vpop.permute.xlu0 %740
    %v742 = vsub.f32 %v712, %v731
    %v743 = vsub.f32 %v717, %v733
    %v744 = vsub.f32 %v712, %v729
    %v745 = vsub.f32 %v717, %v728
    %v746 = vsub.f32 %v712, %v735
    %v747 = vsub.f32 %v717, %v737
    %v748 = vsub.f32 %v712, %v739
    %v749 = vsub.f32 %v717, %v741
    %v750 = vmul.f32 %v742, %v742
    %v751 = vmul.f32 %v743, %v743
    %v752 = vadd.f32 %v435, %v750
    %v753 = vadd.f32 %v436, %v751
    %v754 = vmul.f32 %v744, %v744
    %v755 = vmul.f32 %v745, %v745
    %v756 = vadd.f32 %v437, %v754
    %v757 = vadd.f32 %v438, %v755
    %v758 = vmul.f32 %v746, %v746
    %v759 = vmul.f32 %v747, %v747
    %v760 = vadd.f32 %v439, %v758
    %v761 = vadd.f32 %v440, %v759
    %v762 = vmul.f32 %v748, %v748
    %v763 = vmul.f32 %v749, %v749
    %v764 = vadd.f32 %v441, %v762
    %v765 = vadd.f32 %v442, %v763
    %s766 = scalar_lea.vmem [#allocation2], 32
    %v767 = vld [vmem:[%s766] sm:$0xff]
    %v768 = vld [vmem:[%s766 + $0x8] sm:$0xff]
    %769 = vrot.lane.b32.xlu0 %v767, 124
    %v770 = vpop.permute.xlu0 %769
    %771 = vrot.lane.b32.xlu0 %v768, 124
    %v772 = vpop.permute.xlu0 %771
    %v773 = vmul.f32 %v770, 0.39894348
    %v774 = vmul.f32 %v772, 0.39894348
    %775 = vrot.lane.b32.xlu0 %v767, 120
    %v776 = vpop.permute.xlu0 %775
    %777 = vrot.lane.b32.xlu0 %v768, 120
    %v778 = vpop.permute.xlu0 %777
    %v779 = vadd.f32 %v767, %v776
    %v780 = vadd.f32 %v768, %v778
    %v781 = vmul.f32 %v779, 0.00013383062
    %v782 = vmul.f32 %v780, 0.00013383062
    %v783 = vadd.f32 %v773, %v781
    %v784 = vadd.f32 %v774, %v782
    %785 = vrot.lane.b32.xlu0 %v767, 127
    %v786 = vpop.permute.xlu0 %785
    %787 = vrot.lane.b32.xlu0 %v768, 127
    %v788 = vpop.permute.xlu0 %787
    %789 = vrot.lane.b32.xlu0 %v767, 121
    %v790 = vpop.permute.xlu0 %789
    %791 = vrot.lane.b32.xlu0 %v768, 121
    %v792 = vpop.permute.xlu0 %791
    %v793 = vadd.f32 %v786, %v790
    %v794 = vadd.f32 %v788, %v792
    %v795 = vmul.f32 %v793, 0.0044318615
    %v796 = vmul.f32 %v794, 0.0044318615
    %v797 = vadd.f32 %v783, %v795
    %v798 = vadd.f32 %v784, %v796
    %799 = vrot.lane.b32.xlu0 %v767, 126
    %v800 = vpop.permute.xlu0 %799
    %801 = vrot.lane.b32.xlu0 %v768, 126
    %v802 = vpop.permute.xlu0 %801
    %803 = vrot.lane.b32.xlu0 %v767, 122
    %v804 = vpop.permute.xlu0 %803
    %805 = vrot.lane.b32.xlu0 %v768, 122
    %v806 = vpop.permute.xlu0 %805
    %v807 = vadd.f32 %v800, %v804
    %v808 = vadd.f32 %v802, %v806
    %v809 = vmul.f32 %v807, 0.053991128
    %v810 = vmul.f32 %v808, 0.053991128
    %v811 = vadd.f32 %v797, %v809
    %v812 = vadd.f32 %v798, %v810
    %813 = vrot.lane.b32.xlu0 %v767, 125
    %v814 = vpop.permute.xlu0 %813
    %815 = vrot.lane.b32.xlu0 %v768, 125
    %v816 = vpop.permute.xlu0 %815
    %817 = vrot.lane.b32.xlu0 %v767, 123
    %v818 = vpop.permute.xlu0 %817
    %819 = vrot.lane.b32.xlu0 %v768, 123
    %v820 = vpop.permute.xlu0 %819
    %v821 = vadd.f32 %v814, %v818
    %v822 = vadd.f32 %v816, %v820
    %v823 = vmul.f32 %v821, 0.24197145
    %v824 = vmul.f32 %v822, 0.24197145
    %v825 = vadd.f32 %v811, %v823
    %v826 = vadd.f32 %v812, %v824
    %s827 = scalar_lea.vmem [#allocation5], 32
    %v828 = vld [vmem:[%s827] sm:$0xff]
    %v829 = vld [vmem:[%s827 + $0x8] sm:$0xff]
    %830 = vrot.lane.b32.xlu0 %v828, 124
    %v831 = vpop.permute.xlu0 %830
    %832 = vrot.lane.b32.xlu0 %v829, 124
    %v833 = vpop.permute.xlu0 %832
    %v834 = vmul.f32 %v831, 0.39894348
    %v835 = vmul.f32 %v833, 0.39894348
    %836 = vrot.lane.b32.xlu0 %v828, 120
    %v837 = vpop.permute.xlu0 %836
    %838 = vrot.lane.b32.xlu0 %v829, 120
    %v839 = vpop.permute.xlu0 %838
    %v840 = vadd.f32 %v828, %v837
    %v841 = vadd.f32 %v829, %v839
    %v842 = vmul.f32 %v840, 0.00013383062
    %v843 = vmul.f32 %v841, 0.00013383062
    %v844 = vadd.f32 %v834, %v842
    %v845 = vadd.f32 %v835, %v843
    %846 = vrot.lane.b32.xlu0 %v828, 127
    %v847 = vpop.permute.xlu0 %846
    %848 = vrot.lane.b32.xlu0 %v829, 127
    %v849 = vpop.permute.xlu0 %848
    %850 = vrot.lane.b32.xlu0 %v828, 121
    %v851 = vpop.permute.xlu0 %850
    %852 = vrot.lane.b32.xlu0 %v829, 121
    %v853 = vpop.permute.xlu0 %852
    %v854 = vadd.f32 %v847, %v851
    %v855 = vadd.f32 %v849, %v853
    %v856 = vmul.f32 %v854, 0.0044318615
    %v857 = vmul.f32 %v855, 0.0044318615
    %v858 = vadd.f32 %v844, %v856
    %v859 = vadd.f32 %v845, %v857
    %860 = vrot.lane.b32.xlu0 %v828, 126
    %v861 = vpop.permute.xlu0 %860
    %862 = vrot.lane.b32.xlu0 %v829, 126
    %v863 = vpop.permute.xlu0 %862
    %864 = vrot.lane.b32.xlu0 %v828, 122
    %v865 = vpop.permute.xlu0 %864
    %866 = vrot.lane.b32.xlu0 %v829, 122
    %v867 = vpop.permute.xlu0 %866
    %v868 = vadd.f32 %v861, %v865
    %v869 = vadd.f32 %v863, %v867
    %v870 = vmul.f32 %v868, 0.053991128
    %v871 = vmul.f32 %v869, 0.053991128
    %v872 = vadd.f32 %v858, %v870
    %v873 = vadd.f32 %v859, %v871
    %874 = vrot.lane.b32.xlu0 %v828, 125
    %v875 = vpop.permute.xlu0 %874
    %876 = vrot.lane.b32.xlu0 %v829, 125
    %v877 = vpop.permute.xlu0 %876
    %878 = vrot.lane.b32.xlu0 %v828, 123
    %v879 = vpop.permute.xlu0 %878
    %880 = vrot.lane.b32.xlu0 %v829, 123
    %v881 = vpop.permute.xlu0 %880
    %v882 = vadd.f32 %v875, %v879
    %v883 = vadd.f32 %v877, %v881
    %v884 = vmul.f32 %v882, 0.24197145
    %v885 = vmul.f32 %v883, 0.24197145
    %v886 = vadd.f32 %v872, %v884
    %v887 = vadd.f32 %v873, %v885
    %888 = vmatprep.subr.mxu0 0.0
    %889 = vmatpush1.msra.mxu0 %v886
    %890 = vmatprep.subr.mxu0 0.0
    %891 = vmatpush1.msra.mxu0 %v887
    %892 = vmatprep.subr.mxu0 0.0
    %893 = vmatpush1.msra.mxu0 0.0
    %894 = vmatprep.subr.mxu0 0.0
    %895 = vmatpush1.msra.mxu0 0.0
    %896 = vmatprep.subr.mxu0 0.0
    %897 = vmatpush1.msra.mxu0 0.0
    %898 = vmatprep.subr.mxu0 0.0
    %899 = vmatpush1.msra.mxu0 0.0
    %900 = vmatprep.subr.mxu0 0.0
    %901 = vmatpush1.msra.mxu0 0.0
    %902 = vmatprep.subr.mxu0 0.0
    %903 = vmatpush1.msra.mxu0 0.0
    %904 = vmatprep.subr.mxu0 0.0
    %905 = vmatpush1.msra.mxu0 0.0
    %906 = vmatprep.subr.mxu0 0.0
    %907 = vmatpush1.msra.mxu0 0.0
    %908 = vmatprep.subr.mxu0 0.0
    %909 = vmatpush1.msra.mxu0 0.0
    %910 = vmatprep.subr.mxu0 0.0
    %911 = vmatpush1.msra.mxu0 0.0
    %912 = vmatprep.subr.mxu0 0.0
    %913 = vmatpush1.msra.mxu0 0.0
    %914 = vmatprep.subr.mxu0 0.0
    %915 = vmatpush1.msra.mxu0 0.0
    %916 = vmatprep.subr.mxu0 0.0
    %917 = vmatpush1.msra.mxu0 0.0
    %918 = vmatprep.subr.mxu0 0.0
    %919 = vmatpush1.msra.mxu0 0.0
    %920 = vmatprep.subr.mxu0 0.0
    %921 = vmatpush1.msra.mxu0 0.0
    %922 = vmatprep.subr.mxu0 0.0
    %923 = vmatpush1.msra.mxu0 0.0
    %924 = vmatprep.subr.mxu0 0.0
    %925 = vmatpush1.msra.mxu0 0.0
    %926 = vmatprep.subr.mxu0 0.0
    %927 = vmatpush1.msra.mxu0 0.0
    %928 = vmatprep.subr.mxu0 0.0
    %929 = vmatpush1.msra.mxu0 0.0
    %930 = vmatprep.subr.mxu0 0.0
    %931 = vmatpush1.msra.mxu0 0.0
    %932 = vmatprep.subr.mxu0 0.0
    %933 = vmatpush1.msra.mxu0 0.0
    %934 = vmatprep.subr.mxu0 0.0
    %935 = vmatpush1.msra.mxu0 0.0
    %936 = vmatprep.subr.mxu0 0.0
    %937 = vmatpush1.msra.mxu0 0.0
    %938 = vmatprep.subr.mxu0 0.0
    %939 = vmatpush1.msra.mxu0 0.0
    %940 = vmatprep.subr.mxu0 0.0
    %941 = vmatpush1.msra.mxu0 0.0
    %942 = vmatprep.subr.mxu0 0.0
    %943 = vmatpush1.msra.mxu0 0.0
    %944 = vmatprep.subr.mxu0 0.0
    %945 = vmatpush1.msra.mxu0 0.0
    %946 = vmatprep.subr.mxu0 0.0
    %947 = vmatpush1.msra.mxu0 0.0
    %948 = vmatprep.subr.mxu0 0.0
    %949 = vmatpush1.msra.mxu0 0.0
    %950 = vmatprep.subr.mxu0 0.0
    %951 = vmatpush1.msra.mxu0 0.0
    %952 = vmatprep.mubr.f32.mxu0 0.0
    %953 = vmatmul.mubr.f32.gmra.mrb[0].mxu0 %v230
    %v954 = vpop.f32.mrb[0].mxu0
    %v955 = vadd.f32 0.0, %v954
    %v956 = vpop.f32.mrb[0].mxu0
    %957 = vmatprep.mubr.f32.mxu0 0.0
    %958 = vmatmul.mubr.f32.gmra.mrb[0].mxu0 %v233
    %v959 = vpop.f32.mrb[0].mxu0
    %v960 = vadd.f32 0.0, %v959
    %v961 = vpop.f32.mrb[0].mxu0
    %962 = vmatprep.mubr.f32.mxu0 0.0
    %963 = vmatmul.mubr.f32.gmra.mrb[0].mxu0 %v236
    %v964 = vpop.f32.mrb[0].mxu0
    %v965 = vadd.f32 0.0, %v964
    %v966 = vpop.f32.mrb[0].mxu0
    %967 = vdwg.mxu0
    %968 = vmatprep.subr.mxu0 0.0
    %969 = vmatpush1.msra.mxu0 %v825
    %970 = vmatprep.subr.mxu0 0.0
    %971 = vmatpush1.msra.mxu0 %v826
    %972 = vmatprep.subr.mxu0 0.0
    %973 = vmatpush1.msra.mxu0 0.0
    %974 = vmatprep.subr.mxu0 0.0
    %975 = vmatpush1.msra.mxu0 0.0
    %976 = vmatprep.subr.mxu0 0.0
    %977 = vmatpush1.msra.mxu0 0.0
    %978 = vmatprep.subr.mxu0 0.0
    %979 = vmatpush1.msra.mxu0 0.0
    %980 = vmatprep.subr.mxu0 0.0
    %981 = vmatpush1.msra.mxu0 0.0
    %982 = vmatprep.subr.mxu0 0.0
    %983 = vmatpush1.msra.mxu0 0.0
    %984 = vmatprep.subr.mxu0 0.0
    %985 = vmatpush1.msra.mxu0 0.0
    %986 = vmatprep.subr.mxu0 0.0
    %987 = vmatpush1.msra.mxu0 0.0
    %988 = vmatprep.subr.mxu0 0.0
    %989 = vmatpush1.msra.mxu0 0.0
    %990 = vmatprep.subr.mxu0 0.0
    %991 = vmatpush1.msra.mxu0 0.0
    %992 = vmatprep.subr.mxu0 0.0
    %993 = vmatpush1.msra.mxu0 0.0
    %994 = vmatprep.subr.mxu0 0.0
    %995 = vmatpush1.msra.mxu0 0.0
    %996 = vmatprep.subr.mxu0 0.0
    %997 = vmatpush1.msra.mxu0 0.0
    %998 = vmatprep.subr.mxu0 0.0
    %999 = vmatpush1.msra.mxu0 0.0
    %1000 = vmatprep.subr.mxu0 0.0
    %1001 = vmatpush1.msra.mxu0 0.0
    %1002 = vmatprep.subr.mxu0 0.0
    %1003 = vmatpush1.msra.mxu0 0.0
    %1004 = vmatprep.subr.mxu0 0.0
    %1005 = vmatpush1.msra.mxu0 0.0
    %1006 = vmatprep.subr.mxu0 0.0
    %1007 = vmatpush1.msra.mxu0 0.0
    %1008 = vmatprep.subr.mxu0 0.0
    %1009 = vmatpush1.msra.mxu0 0.0
    %1010 = vmatprep.subr.mxu0 0.0
    %1011 = vmatpush1.msra.mxu0 0.0
    %1012 = vmatprep.subr.mxu0 0.0
    %1013 = vmatpush1.msra.mxu0 0.0
    %1014 = vmatprep.subr.mxu0 0.0
    %1015 = vmatpush1.msra.mxu0 0.0
    %1016 = vmatprep.subr.mxu0 0.0
    %1017 = vmatpush1.msra.mxu0 0.0
    %1018 = vmatprep.subr.mxu0 0.0
    %1019 = vmatpush1.msra.mxu0 0.0
    %1020 = vmatprep.subr.mxu0 0.0
    %1021 = vmatpush1.msra.mxu0 0.0
    %1022 = vmatprep.subr.mxu0 0.0
    %1023 = vmatpush1.msra.mxu0 0.0
    %1024 = vmatprep.subr.mxu0 0.0
    %1025 = vmatpush1.msra.mxu0 0.0
    %1026 = vmatprep.subr.mxu0 0.0
    %1027 = vmatpush1.msra.mxu0 0.0
    %1028 = vmatprep.subr.mxu0 0.0
    %1029 = vmatpush1.msra.mxu0 0.0
    %1030 = vmatprep.subr.mxu0 0.0
    %1031 = vmatpush1.msra.mxu0 0.0
    %1032 = vmatprep.mubr.f32.mxu0 0.0
    %1033 = vmatmul.mubr.f32.gmra.mrb[0].mxu0 %v319
    %v1034 = vpop.f32.mrb[0].mxu0
    %v1035 = vadd.f32 %v955, %v1034
    %v1036 = vpop.f32.mrb[0].mxu0
    %1037 = vmatprep.mubr.f32.mxu0 0.0
    %1038 = vmatmul.mubr.f32.gmra.mrb[0].mxu0 %v322
    %v1039 = vpop.f32.mrb[0].mxu0
    %v1040 = vadd.f32 %v960, %v1039
    %v1041 = vpop.f32.mrb[0].mxu0
    %1042 = vmatprep.mubr.f32.mxu0 0.0
    %1043 = vmatmul.mubr.f32.gmra.mrb[0].mxu0 %v325
    %v1044 = vpop.f32.mrb[0].mxu0
    %v1045 = vadd.f32 %v965, %v1044
    %v1046 = vpop.f32.mrb[0].mxu0
    %1047 = vdwg.mxu0
    %v1048 = vrot.slane %v1035, 1
    %v1049 = vrot.slane %v1040, 1
    %v1050 = vrot.slane %v1045, 1
    %v1051 = vsel %vm412, %v1049, %v1050
    %v1052 = vsel %vm412, %v1048, %v1049
    %1053 = vrot.lane.b32.xlu0 %v1035, 127
    %v1054 = vpop.permute.xlu0 %1053
    %1055 = vrot.lane.b32.xlu0 %v1040, 127
    %v1056 = vpop.permute.xlu0 %1055
    %1057 = vrot.lane.b32.xlu0 %v1052, 127
    %v1058 = vpop.permute.xlu0 %1057
    %1059 = vrot.lane.b32.xlu0 %v1051, 127
    %v1060 = vpop.permute.xlu0 %1059
    %1061 = vrot.lane.b32.xlu0 %v1052, 1
    %v1062 = vpop.permute.xlu0 %1061
    %1063 = vrot.lane.b32.xlu0 %v1051, 1
    %v1064 = vpop.permute.xlu0 %1063
    %v1065 = vsub.f32 %v1035, %v1054
    %v1066 = vsub.f32 %v1040, %v1056
    %v1067 = vsub.f32 %v1035, %v1052
    %v1068 = vsub.f32 %v1040, %v1051
    %v1069 = vsub.f32 %v1035, %v1058
    %v1070 = vsub.f32 %v1040, %v1060
    %v1071 = vsub.f32 %v1035, %v1062
    %v1072 = vsub.f32 %v1040, %v1064
    %v1073 = vmul.f32 %v1065, %v1065
    %v1074 = vmul.f32 %v1066, %v1066
    %v1075 = vadd.f32 %v752, %v1073
    %v1076 = vadd.f32 %v753, %v1074
    %v1077 = vmul.f32 %v1067, %v1067
    %v1078 = vmul.f32 %v1068, %v1068
    %v1079 = vadd.f32 %v756, %v1077
    %v1080 = vadd.f32 %v757, %v1078
    %v1081 = vmul.f32 %v1069, %v1069
    %v1082 = vmul.f32 %v1070, %v1070
    %v1083 = vadd.f32 %v760, %v1081
    %v1084 = vadd.f32 %v761, %v1082
    %v1085 = vmul.f32 %v1071, %v1071
    %v1086 = vmul.f32 %v1072, %v1072
    %v1087 = vadd.f32 %v764, %v1085
    %v1088 = vadd.f32 %v765, %v1086
    %v1089 = vrsqrt.pop %v1075
    %v1090 = vmul.f32 %v1075, %v1089
    %vm1091 = vcmp.eq.f32.partialorder %v1075, inf
    %v1092 = vsel %vm1091, %v1075, %v1090
    %vm1093 = vcmp.eq.f32.partialorder %v1075, 0.0
    %v1094 = vand.u32 %v1075, 2147483648
    %v1095 = vsel %vm1093, %v1094, %v1092
    %v1096 = vrsqrt.pop %v1076
    %v1097 = vmul.f32 %v1076, %v1096
    %vm1098 = vcmp.eq.f32.partialorder %v1076, inf
    %v1099 = vsel %vm1098, %v1076, %v1097
    %vm1100 = vcmp.eq.f32.partialorder %v1076, 0.0
    %v1101 = vand.u32 %v1076, 2147483648
    %v1102 = vsel %vm1100, %v1101, %v1099
    %1103 = vst [vmem:[#allocation7] sm:$0xff] %v1095
    %1104 = vst [vmem:[#allocation7 + $0x8] sm:$0xff] %v1102
    %v1105 = vrsqrt.pop %v1079
    %v1106 = vmul.f32 %v1079, %v1105
    %vm1107 = vcmp.eq.f32.partialorder %v1079, inf
    %v1108 = vsel %vm1107, %v1079, %v1106
    %vm1109 = vcmp.eq.f32.partialorder %v1079, 0.0
    %v1110 = vand.u32 %v1079, 2147483648
    %v1111 = vsel %vm1109, %v1110, %v1108
    %v1112 = vrsqrt.pop %v1080
    %v1113 = vmul.f32 %v1080, %v1112
    %vm1114 = vcmp.eq.f32.partialorder %v1080, inf
    %v1115 = vsel %vm1114, %v1080, %v1113
    %vm1116 = vcmp.eq.f32.partialorder %v1080, 0.0
    %v1117 = vand.u32 %v1080, 2147483648
    %v1118 = vsel %vm1116, %v1117, %v1115
    %s1119 = scalar_lea.vmem [#allocation7], 16
    %1120 = vst [vmem:[%s1119] sm:$0xff] %v1111
    %1121 = vst [vmem:[%s1119 + $0x8] sm:$0xff] %v1118
    %v1122 = vrsqrt.pop %v1083
    %v1123 = vmul.f32 %v1083, %v1122
    %vm1124 = vcmp.eq.f32.partialorder %v1083, inf
    %v1125 = vsel %vm1124, %v1083, %v1123
    %vm1126 = vcmp.eq.f32.partialorder %v1083, 0.0
    %v1127 = vand.u32 %v1083, 2147483648
    %v1128 = vsel %vm1126, %v1127, %v1125
    %v1129 = vrsqrt.pop %v1084
    %v1130 = vmul.f32 %v1084, %v1129
    %vm1131 = vcmp.eq.f32.partialorder %v1084, inf
    %v1132 = vsel %vm1131, %v1084, %v1130
    %vm1133 = vcmp.eq.f32.partialorder %v1084, 0.0
    %v1134 = vand.u32 %v1084, 2147483648
    %v1135 = vsel %vm1133, %v1134, %v1132
    %s1136 = scalar_lea.vmem [#allocation7], 32
    %1137 = vst [vmem:[%s1136] sm:$0xff] %v1128
    %1138 = vst [vmem:[%s1136 + $0x8] sm:$0xff] %v1135
    %v1139 = vrsqrt.pop %v1087
    %v1140 = vmul.f32 %v1087, %v1139
    %vm1141 = vcmp.eq.f32.partialorder %v1087, inf
    %v1142 = vsel %vm1141, %v1087, %v1140
    %vm1143 = vcmp.eq.f32.partialorder %v1087, 0.0
    %v1144 = vand.u32 %v1087, 2147483648
    %v1145 = vsel %vm1143, %v1144, %v1142
    %v1146 = vrsqrt.pop %v1088
    %v1147 = vmul.f32 %v1088, %v1146
    %vm1148 = vcmp.eq.f32.partialorder %v1088, inf
    %v1149 = vsel %vm1148, %v1088, %v1147
    %vm1150 = vcmp.eq.f32.partialorder %v1088, 0.0
    %v1151 = vand.u32 %v1088, 2147483648
    %v1152 = vsel %vm1150, %v1151, %v1149
    %s1153 = scalar_lea.vmem [#allocation7], 48
    %1154 = vst [vmem:[%s1153] sm:$0xff] %v1145
    %1155 = vst [vmem:[%s1153 + $0x8] sm:$0xff] %v1152
    // Predicated region
    $region26: #{tpu_custom_call.1} parent=1 // pred_check
      _
    $region27: #{tpu_custom_call.1} parent=1 // pred_check_branch
      %1157 = sbr.rel (0) target = $region29
    $region28: #{tpu_custom_call.1} parent=1 // pred_region
      %s1159 = ssub.s32 1024, 1024
      %1160 = vsyncadd [#allocation4], %s1159
      %s1161 = sshll.u32 [#allocation7], 4
      %s1162 = int_to_ptr.vmem [resolvable:$true] %s1161
      %1167 = dma.vmem_to_hbm [thread:$0]  %s1162, 1024, %s4, [#allocation4], 128, 128, 8
    $region29: #{tpu_custom_call.1} parent=1 // pred_fallthru
      _
    // Predicated region
    $region30: #{tpu_custom_call.1} parent=1 // pred_check
      _
    $region31: #{tpu_custom_call.1} parent=1 // pred_check_branch
      %1169 = sbr.rel (0) target = $region33
    $region32: #{tpu_custom_call.1} parent=1 // pred_region
      %1170 = dma.done [#allocation4], 1024
    $region33: #{tpu_custom_call.1} parent=1 // pred_fallthru
      _
    %1171 = vsyncpa [#allocation3], 1
    %1172 = vsyncpa [#allocation6], 1
    %1173 = vsyncpa [#allocation4], 1

</llo_original>
